<compile_context>
chip_gen: v7x
topology: tpu7x:2x2x1
jax: 0.10.0
libtpu: 0.0.40
codegen_flags: <defaults>
</compile_context>

<pallas_src>
from functools import partial

import jax
import jax.numpy as jnp
import numpy as np
from jax import lax
from jax.experimental import pallas as pl
from jax.experimental.pallas import tpu as pltpu


def _state_repr_kernel(ids_ref,    # (N+1, TB) int32, VMEM  row 0 = user id,
                       #                               rows 1..N = item ids + Vu
                       tab_ref,    # (2*Ep, Vu+Vi) f32, VMEM block-diag [[U^T,0],[0,I^T]]
                       w_ref,      # (N+1,) f32, SMEM  [1.0, conv_w_0 .. conv_w_{N-1}]
                       b_ref,      # (1,)   f32, SMEM  conv bias
                       out_ref):   # (3*Ep, TB) f32, VMEM  lane-dense output
    two_ep, v_tot = tab_ref.shape
    ep = two_ep // 2
    n_rows, tb = ids_ref.shape

    ids = ids_ref[...]                                            # (N+1, TB)
    iota = lax.broadcasted_iota(jnp.int32, (v_tot, tb), 0)        # (Vtot, TB)

    # Combined weighted one-/multi-hot: user row gets weight 1.0, item rows
    # accumulate conv weights (duplicates must SUM, so keep the add).
    oh = jnp.where(iota == ids[0:1, :], w_ref[0], 0.0)            # user one-hot
    for n in range(1, n_rows):                                    # N small & static
        oh = oh + jnp.where(iota == ids[n:n + 1, :], w_ref[n], 0.0)

    # Single fused MXU call: (2Ep, Vtot) @ (Vtot, TB) -> [ue ; drr_raw]
    res = jnp.dot(tab_ref[...], oh,
                  preferred_element_type=jnp.float32,
                  precision=lax.Precision.HIGHEST)                # (2Ep, TB)

    ue = res[0:ep, :]
    drr = res[ep:2 * ep, :] + b_ref[0]

    # torch.cat((ue, ue*drr, drr), 1), written as 3 aligned (Ep, TB) slabs.
    out_ref[0:ep, :] = ue
    out_ref[ep:2 * ep, :] = ue * drr
    out_ref[2 * ep:3 * ep, :] = drr


@partial(jax.jit,
         static_argnames=("E", "Ep", "Vu", "tile_b", "lane_major_out"))
def _state_repr_forward(tab, wvec, bias, user_ids, mem_ids, *,
                        E, Ep, Vu, tile_b, lane_major_out):
    B = user_ids.shape[0]
    N = mem_ids.shape[1]
    Vtot = tab.shape[1]

    num_tiles = pl.cdiv(B, tile_b)
    B_pad = num_tiles * tile_b

    # One packed id operand: row 0 = user ids, rows 1..N = item ids (+Vu so
    # they index the item block of the fused table). Padded lanes compute
    # discarded garbage (fine: no batch reduction in-kernel).
    ids = jnp.concatenate(
        [user_ids.astype(jnp.int32)[None, :],
         mem_ids.astype(jnp.int32).T + jnp.int32(Vu)], axis=0)     # (N+1, B)
    ids = jnp.pad(ids, ((0, 0), (0, B_pad - B)))                   # (N+1, B_pad)

    flops = (2 * B_pad * (2 * Ep) * Vtot          # fused matmul
             + 3 * B_pad * Vtot * (N + 1)         # cmp/select/add multi-hot
             + 3 * B_pad * Ep)                    # bias add + ue*drr
    bytes_accessed = 4 * ((N + 1) * B_pad + 2 * Ep * Vtot
                          + 3 * Ep * B_pad + (N + 2))

    out_t = pl.pallas_call(
        _state_repr_kernel,
        out_shape=jax.ShapeDtypeStruct((3 * Ep, B_pad), jnp.float32),
        grid=(num_tiles,),
        in_specs=[
            pl.BlockSpec((N + 1, tile_b), lambda i: (0, i)),        # packed ids
            pl.BlockSpec(memory_space=pltpu.MemorySpace.VMEM),      # fused table
            pl.BlockSpec(memory_space=pltpu.MemorySpace.SMEM),      # weights
            pl.BlockSpec(memory_space=pltpu.MemorySpace.SMEM),      # bias
        ],
        out_specs=pl.BlockSpec((3 * Ep, tile_b), lambda i: (0, i)),
        compiler_params=pltpu.CompilerParams(
            dimension_semantics=("parallel",),
            vmem_limit_bytes=32 * 1024 * 1024),
        cost_estimate=pl.CostEstimate(flops=flops, transcendentals=0,
                                      bytes_accessed=bytes_accessed),
    )(ids, tab, wvec, bias)

    # Strip E padding. Keep lane-dense layout if the consumer can take it;
    # otherwise transpose back to torch's (B, 3E) inside this same jit.
    segs = [out_t[k * Ep:k * Ep + E, :B] for k in range(3)]
    res_lanes = jnp.concatenate(segs, axis=0)                       # (3E, B)
    if lane_major_out:
        return res_lanes
    return res_lanes.T                                              # (B, 3E)


def make_state_repr_forward(user_table, item_table, conv_w, conv_b, *,
                            tile_b=512, lane_major_out=False):
    """Hoisted, one-time parameter prep; returns a jitted forward(user, memory).

    user_table: (user_num, E) f32    item_table: (item_num+1, E) f32 (last row = 0)
    conv_w: Conv1d(N,1,1) weight (any shape reshapable to (N,))   conv_b: (1,)
    """
    Vu, E = user_table.shape
    Vi, _ = item_table.shape
    Ep = -(-E // 8) * 8                     # keep slab stores 8-sublane aligned

    ut = jnp.pad(user_table.astype(jnp.float32), ((0, 0), (0, Ep - E))).T   # (Ep, Vu)
    it = jnp.pad(item_table.astype(jnp.float32), ((0, 0), (0, Ep - E))).T   # (Ep, Vi)
    tab = jnp.zeros((2 * Ep, Vu + Vi), jnp.float32)
    tab = tab.at[0:Ep, 0:Vu].set(ut)
    tab = tab.at[Ep:2 * Ep, Vu:Vu + Vi].set(it)                             # block-diag

    wvec = jnp.concatenate([jnp.ones((1,), jnp.float32),
                            conv_w.reshape(-1).astype(jnp.float32)])        # (N+1,)
    bvec = conv_b.reshape(1).astype(jnp.float32)

    def forward(user_ids, mem_ids):
        return _state_repr_forward(tab, wvec, bvec, user_ids, mem_ids,
                                   E=E, Ep=Ep, Vu=Vu,
                                   tile_b=tile_b, lane_major_out=lane_major_out)

    return forward


if __name__ == "__main__":
    key = jax.random.PRNGKey(0)
    user_num, item_num = 10, 20
    E, N, B = 8, 5, 500                          # embedding_dim=8, params['N']=5

    k1, k2, k3, k4, k5 = jax.random.split(key, 5)
    # nn.init.normal_(std=0.01) for both embedding tables
    user_table = 0.01 * jax.random.normal(k1, (user_num, E), jnp.float32)
    item_table = 0.01 * jax.random.normal(k2, (item_num + 1, E), jnp.float32)
    item_table = item_table.at[-1].set(0.0)      # padding_idx = item_num -> zero row
    # nn.init.uniform_ on Conv1d(N, 1, 1) weight, zero bias
    conv_w = jax.random.uniform(k3, (N,), jnp.float32)
    conv_b = jnp.zeros((1,), jnp.float32)

    user_ids = jax.random.randint(k4, (B,), 0, user_num, dtype=jnp.int32)
    mem_ids = jax.random.randint(k5, (B, N), 0, item_num + 1, dtype=jnp.int32)

    forward = make_state_repr_forward(user_table, item_table, conv_w, conv_b,
                                      tile_b=512)
    out = jax.block_until_ready(forward(user_ids, mem_ids))          # (B, 3E)

    # pure-JAX reference (elementwise weighted sum -> exact f32, no MXU path)
    ue = user_table[user_ids]                                      # (B, E)
    ie = item_table[mem_ids]                                       # (B, N, E)
    drr = jnp.sum(ie * conv_w[None, :, None], axis=1) + conv_b[0]  # (B, E)
    ref = jnp.concatenate([ue, ue * drr, drr], axis=1)             # (B, 3E)
    np.testing.assert_allclose(np.asarray(out), np.asarray(ref), rtol=1e-5, atol=1e-6)

    print("KERNEL_OK")
</pallas_src>

<mosaic_0001>
module attributes {stable_mosaic.version = 11 : i64} {
  func.func @_state_repr_kernel(%arg0: i32, %arg1: memref<6x512xi32, #tpu.memory_space<vmem>>, %arg2: memref<16x31xf32, #tpu.memory_space<vmem>>, %arg3: memref<6xf32, #tpu.memory_space<smem>>, %arg4: memref<1xf32, #tpu.memory_space<smem>>, %arg5: memref<24x512xf32, #tpu.memory_space<vmem>>) attributes {dimension_semantics = [#tpu.dimension_semantics<parallel>], iteration_bounds = array<i64: 1>, scalar_prefetch = 0 : i64, scratch_operands = 0 : i64, tpu.core_type = #tpu.core_type<tc>, window_params = [{transform_indices = @transform_0, window_bounds = array<i64: 6, 512>}, {pipeline_mode = #tpu.pipeline_mode<synchronous>, transform_indices = @transform_1, window_bounds = array<i64: 16, 31>}, {transform_indices = @transform_2, window_bounds = array<i64: 6>}, {transform_indices = @transform_3, window_bounds = array<i64: 1>}, {transform_indices = @transform_4, window_bounds = array<i64: 24, 512>}]} {
    %c0 = arith.constant 0 : index
    %c0_0 = arith.constant 0 : index
    %0 = vector.load %arg1[%c0, %c0_0] : memref<6x512xi32, #tpu.memory_space<vmem>>, vector<6x512xi32>
    %1 = tpu.iota {dimensions = array<i32: 0>} : vector<31x512xi32>
    %2 = vector.extract_strided_slice %0 {offsets = [0, 0], sizes = [1, 512], strides = [1, 1]} : vector<6x512xi32> to vector<1x512xi32>
    %3 = vector.broadcast %2 : vector<1x512xi32> to vector<31x512xi32>
    %4 = arith.cmpi eq, %1, %3 : vector<31x512xi32>
    %c0_1 = arith.constant 0 : index
    %5 = memref.load %arg3[%c0_1] : memref<6xf32, #tpu.memory_space<smem>>
    %cst = arith.constant 0.000000e+00 : f32
    %6 = vector.broadcast %5 : f32 to vector<31x512xf32>
    %7 = vector.broadcast %cst : f32 to vector<31x512xf32>
    %8 = arith.select %4, %6, %7 : vector<31x512xi1>, vector<31x512xf32>
    %9 = vector.extract_strided_slice %0 {offsets = [1, 0], sizes = [1, 512], strides = [1, 1]} : vector<6x512xi32> to vector<1x512xi32>
    %10 = vector.broadcast %9 : vector<1x512xi32> to vector<31x512xi32>
    %11 = arith.cmpi eq, %1, %10 : vector<31x512xi32>
    %c1 = arith.constant 1 : index
    %12 = memref.load %arg3[%c1] : memref<6xf32, #tpu.memory_space<smem>>
    %cst_2 = arith.constant 0.000000e+00 : f32
    %13 = vector.broadcast %12 : f32 to vector<31x512xf32>
    %14 = vector.broadcast %cst_2 : f32 to vector<31x512xf32>
    %15 = arith.select %11, %13, %14 : vector<31x512xi1>, vector<31x512xf32>
    %16 = arith.addf %8, %15 : vector<31x512xf32>
    %17 = vector.extract_strided_slice %0 {offsets = [2, 0], sizes = [1, 512], strides = [1, 1]} : vector<6x512xi32> to vector<1x512xi32>
    %18 = vector.broadcast %17 : vector<1x512xi32> to vector<31x512xi32>
    %19 = arith.cmpi eq, %1, %18 : vector<31x512xi32>
    %c2 = arith.constant 2 : index
    %20 = memref.load %arg3[%c2] : memref<6xf32, #tpu.memory_space<smem>>
    %cst_3 = arith.constant 0.000000e+00 : f32
    %21 = vector.broadcast %20 : f32 to vector<31x512xf32>
    %22 = vector.broadcast %cst_3 : f32 to vector<31x512xf32>
    %23 = arith.select %19, %21, %22 : vector<31x512xi1>, vector<31x512xf32>
    %24 = arith.addf %16, %23 : vector<31x512xf32>
    %25 = vector.extract_strided_slice %0 {offsets = [3, 0], sizes = [1, 512], strides = [1, 1]} : vector<6x512xi32> to vector<1x512xi32>
    %26 = vector.broadcast %25 : vector<1x512xi32> to vector<31x512xi32>
    %27 = arith.cmpi eq, %1, %26 : vector<31x512xi32>
    %c3 = arith.constant 3 : index
    %28 = memref.load %arg3[%c3] : memref<6xf32, #tpu.memory_space<smem>>
    %cst_4 = arith.constant 0.000000e+00 : f32
    %29 = vector.broadcast %28 : f32 to vector<31x512xf32>
    %30 = vector.broadcast %cst_4 : f32 to vector<31x512xf32>
    %31 = arith.select %27, %29, %30 : vector<31x512xi1>, vector<31x512xf32>
    %32 = arith.addf %24, %31 : vector<31x512xf32>
    %33 = vector.extract_strided_slice %0 {offsets = [4, 0], sizes = [1, 512], strides = [1, 1]} : vector<6x512xi32> to vector<1x512xi32>
    %34 = vector.broadcast %33 : vector<1x512xi32> to vector<31x512xi32>
    %35 = arith.cmpi eq, %1, %34 : vector<31x512xi32>
    %c4 = arith.constant 4 : index
    %36 = memref.load %arg3[%c4] : memref<6xf32, #tpu.memory_space<smem>>
    %cst_5 = arith.constant 0.000000e+00 : f32
    %37 = vector.broadcast %36 : f32 to vector<31x512xf32>
    %38 = vector.broadcast %cst_5 : f32 to vector<31x512xf32>
    %39 = arith.select %35, %37, %38 : vector<31x512xi1>, vector<31x512xf32>
    %40 = arith.addf %32, %39 : vector<31x512xf32>
    %41 = vector.extract_strided_slice %0 {offsets = [5, 0], sizes = [1, 512], strides = [1, 1]} : vector<6x512xi32> to vector<1x512xi32>
    %42 = vector.broadcast %41 : vector<1x512xi32> to vector<31x512xi32>
    %43 = arith.cmpi eq, %1, %42 : vector<31x512xi32>
    %c5 = arith.constant 5 : index
    %44 = memref.load %arg3[%c5] : memref<6xf32, #tpu.memory_space<smem>>
    %cst_6 = arith.constant 0.000000e+00 : f32
    %45 = vector.broadcast %44 : f32 to vector<31x512xf32>
    %46 = vector.broadcast %cst_6 : f32 to vector<31x512xf32>
    %47 = arith.select %43, %45, %46 : vector<31x512xi1>, vector<31x512xf32>
    %48 = arith.addf %40, %47 : vector<31x512xf32>
    %c0_7 = arith.constant 0 : index
    %c0_8 = arith.constant 0 : index
    %49 = vector.load %arg2[%c0_7, %c0_8] : memref<16x31xf32, #tpu.memory_space<vmem>>, vector<16x31xf32>
    %cst_9 = arith.constant dense<0.000000e+00> : vector<16x512xf32>
    %50 = tpu.matmul %49, %48, %cst_9 {dimension_numbers = #tpu.dot_dimension_numbers<[1], [0], [0], [1], [0, 0, 1, 1], [], []>, precision = #tpu.contract_precision<fp32>} : vector<16x31xf32>, vector<31x512xf32>, vector<16x512xf32> -> vector<16x512xf32>
    %51 = vector.extract_strided_slice %50 {offsets = [0, 0], sizes = [8, 512], strides = [1, 1]} : vector<16x512xf32> to vector<8x512xf32>
    %52 = vector.extract_strided_slice %50 {offsets = [8, 0], sizes = [8, 512], strides = [1, 1]} : vector<16x512xf32> to vector<8x512xf32>
    %c0_10 = arith.constant 0 : index
    %53 = memref.load %arg4[%c0_10] : memref<1xf32, #tpu.memory_space<smem>>
    %54 = vector.broadcast %53 : f32 to vector<8x512xf32>
    %55 = arith.addf %52, %54 : vector<8x512xf32>
    %c0_11 = arith.constant 0 : index
    %c0_12 = arith.constant 0 : index
    %56 = vector.load %arg5[%c0_11, %c0_12] : memref<24x512xf32, #tpu.memory_space<vmem>>, vector<8x512xf32>
    tpu.vector_store %arg5[%c0_11, %c0_12], %51 {strides = array<i32>} : memref<24x512xf32, #tpu.memory_space<vmem>>, vector<8x512xf32>,
    %57 = arith.mulf %51, %55 : vector<8x512xf32>
    %c8 = arith.constant 8 : index
    %c0_13 = arith.constant 0 : index
    %58 = vector.load %arg5[%c8, %c0_13] : memref<24x512xf32, #tpu.memory_space<vmem>>, vector<8x512xf32>
    tpu.vector_store %arg5[%c8, %c0_13], %57 {strides = array<i32>} : memref<24x512xf32, #tpu.memory_space<vmem>>, vector<8x512xf32>,
    %c16 = arith.constant 16 : index
    %c0_14 = arith.constant 0 : index
    %59 = vector.load %arg5[%c16, %c0_14] : memref<24x512xf32, #tpu.memory_space<vmem>>, vector<8x512xf32>
    tpu.vector_store %arg5[%c16, %c0_14], %55 {strides = array<i32>} : memref<24x512xf32, #tpu.memory_space<vmem>>, vector<8x512xf32>,
    return
  }
  func.func @transform_0(%arg0: i32) -> (i32, i32) {
    %c0_i32 = arith.constant 0 : i32
    %c0_i32_0 = arith.constant 0 : i32
    return %c0_i32, %arg0 : i32, i32
  }
  func.func @transform_1(%arg0: i32) -> (i32, i32) {
    %c0_i32 = arith.constant 0 : i32
    %c0_i32_0 = arith.constant 0 : i32
    %c0_i32_1 = arith.constant 0 : i32
    return %c0_i32, %c0_i32_0 : i32, i32
  }
  func.func @transform_2(%arg0: i32) -> i32 {
    %c0_i32 = arith.constant 0 : i32
    %c0_i32_0 = arith.constant 0 : i32
    return %c0_i32 : i32
  }
  func.func @transform_3(%arg0: i32) -> i32 {
    %c0_i32 = arith.constant 0 : i32
    %c0_i32_0 = arith.constant 0 : i32
    return %c0_i32 : i32
  }
  func.func @transform_4(%arg0: i32) -> (i32, i32) {
    %c0_i32 = arith.constant 0 : i32
    %c0_i32_0 = arith.constant 0 : i32
    return %c0_i32, %arg0 : i32, i32
  }
}

</mosaic_0001>

<llo_original>
// kernel: _state_repr_forward.1
$region0: #{_state_repr_forward.1}
  #allocation0 [shape = 'u32[]', space=smem, size = 0x4, offset = 0x4, fixed_abs, tag = 'smem constant byte address 0x4 - core index']
  #allocation1 [shape = 'u32[144,128]{1,0:T(1,128)}', space=vmem, size = 0x12000, scoped, tag = 'internal scratch']
  #allocation2 [shape = 'f32[1]{0:T(128)S(6)}', space=smem, size = 0x200, scoped, tag = 'scoped memory for _state_repr_forward.1']
  %s0 = inlined_call_operand.vmem [shape: s32[6,512], index: 0, kind: input, shape index: {}]
  %s1 = inlined_call_operand.vmem [shape: f32[16,31], index: 1, kind: input, shape index: {}]
  %s2 = inlined_call_operand.vmem [shape: f32[6], index: 2, kind: input, shape index: {}]
  %s3 = inlined_call_operand.<no memory space> [shape: f32[1], index: 3, kind: input, shape index: {}]
  %s4 = inlined_call_operand.vmem [shape: f32[24,512], index: 4, kind: output, shape index: {}]
  %s5 = sld [smem:[#allocation0]]
  $region30: #{_state_repr_forward.1} parent=0
    _
  %s7 = ssub.s32 1, %s5
  %s8 = scalar_select 0, %s7, %s5
  %9 = sst [smem:[#allocation2]] %s3
  $region1: #{_state_repr_forward.1} parent=0
    #allocation3 [shape = 'u8[512]{0}', space=smem, size = 0x200, scoped, tag = 'input window, operand 2, single buffered']
    #allocation4 [shape = 's32[1]{0}', space=sflag, size = 0x4, scoped, tag = 'scoped memory for _state_repr_forward.1']
    %10 = vsyncpa [#allocation4], 0
    // Predicated region
    $region2: #{_state_repr_forward.1} parent=1 // pred_check
      _
    $region3: #{_state_repr_forward.1} parent=1 // pred_check_branch
      %12 = sbr.rel (0) target = $region5
    $region4: #{_state_repr_forward.1} parent=1 // pred_region
      _
    $region5: #{_state_repr_forward.1} parent=1 // pred_fallthru
      _
    // Predicated region
    $region6: #{_state_repr_forward.1} parent=1 // pred_check
      _
    $region7: #{_state_repr_forward.1} parent=1 // pred_check_branch
      %14 = sbr.rel (0) target = $region9
    $region8: #{_state_repr_forward.1} parent=1 // pred_region
      _
    $region9: #{_state_repr_forward.1} parent=1 // pred_fallthru
      _
    // Predicated region
    $region10: #{_state_repr_forward.1} parent=1 // pred_check
      _
    $region11: #{_state_repr_forward.1} parent=1 // pred_check_branch
      %16 = sbr.rel (0) target = $region13
    $region12: #{_state_repr_forward.1} parent=1 // pred_region
      %s18 = ssub.s32 16, 16
      %19 = vsyncadd [#allocation4], %s18
      %s21 = sshll.u32 %s2, 4
      %s22 = int_to_ptr.vmem [resolvable:$true] %s21
      %24 = dma.vmem_to_smem %s22, 16, [#allocation3], [#allocation4]
    $region13: #{_state_repr_forward.1} parent=1 // pred_fallthru
      _
    // Predicated region
    $region14: #{_state_repr_forward.1} parent=1 // pred_check
      _
    $region15: #{_state_repr_forward.1} parent=1 // pred_check_branch
      %26 = sbr.rel (0) target = $region17
    $region16: #{_state_repr_forward.1} parent=1 // pred_region
      _
    $region17: #{_state_repr_forward.1} parent=1 // pred_fallthru
      _
    // Predicated region
    $region18: #{_state_repr_forward.1} parent=1 // pred_check
      _
    $region19: #{_state_repr_forward.1} parent=1 // pred_check_branch
      %28 = sbr.rel (0) target = $region21
    $region20: #{_state_repr_forward.1} parent=1 // pred_region
      %29 = dma.done [#allocation4], 16
    $region21: #{_state_repr_forward.1} parent=1 // pred_fallthru
      _
    %30 = sfence
    %v31 = vld [vmem:[%s0] sm:$0x3f]
    %v32 = vld [vmem:[%s0 + $0x8] sm:$0x3f]
    %v33 = vld [vmem:[%s0 + $0x10] sm:$0x3f]
    %v34 = vld [vmem:[%s0 + $0x18] sm:$0x3f]
    %v35 = vlaneseq
    %v36 = vshrl.u32 %v35, 7
    %v37 = vadd.s32 %v36, 8
    %v38 = vadd.s32 %v36, 16
    %v39 = vadd.s32 %v36, 24
    %v40 = vlaneseq
    %v41 = vshrl.u32 %v40, 7
    %v42 = vsub.s32 0, %v41
    %v43 = vrot.slane %v31, %v42
    %v44 = vlaneseq
    %v45 = vshrl.u32 %v44, 7
    %v46 = vsub.s32 0, %v45
    %v47 = vrot.slane %v32, %v46
    %v48 = vlaneseq
    %v49 = vshrl.u32 %v48, 7
    %v50 = vsub.s32 0, %v49
    %v51 = vrot.slane %v33, %v50
    %v52 = vlaneseq
    %v53 = vshrl.u32 %v52, 7
    %v54 = vsub.s32 0, %v53
    %v55 = vrot.slane %v34, %v54
    %vm56 = vcmp.eq.s32.totalorder %v36, %v43
    %vm57 = vcmp.eq.s32.totalorder %v36, %v47
    %vm58 = vcmp.eq.s32.totalorder %v36, %v51
    %vm59 = vcmp.eq.s32.totalorder %v36, %v55
    %vm60 = vcmp.eq.s32.totalorder %v37, %v43
    %vm61 = vcmp.eq.s32.totalorder %v37, %v47
    %vm62 = vcmp.eq.s32.totalorder %v37, %v51
    %vm63 = vcmp.eq.s32.totalorder %v37, %v55
    %vm64 = vcmp.eq.s32.totalorder %v38, %v43
    %vm65 = vcmp.eq.s32.totalorder %v38, %v47
    %vm66 = vcmp.eq.s32.totalorder %v38, %v51
    %vm67 = vcmp.eq.s32.totalorder %v38, %v55
    %vm68 = vcmp.eq.s32.totalorder %v39, %v43
    %vm69 = vcmp.eq.s32.totalorder %v39, %v47
    %vm70 = vcmp.eq.s32.totalorder %v39, %v51
    %vm71 = vcmp.eq.s32.totalorder %v39, %v55
    %s72 = sld [smem:[#allocation3]]
    %v73 = vstv %s72
    %v74 = vsel %vm56, %v73, 0.0
    %v75 = vsel %vm57, %v73, 0.0
    %v76 = vsel %vm58, %v73, 0.0
    %v77 = vsel %vm59, %v73, 0.0
    %v78 = vsel %vm60, %v73, 0.0
    %v79 = vsel %vm61, %v73, 0.0
    %v80 = vsel %vm62, %v73, 0.0
    %v81 = vsel %vm63, %v73, 0.0
    %v82 = vsel %vm64, %v73, 0.0
    %v83 = vsel %vm65, %v73, 0.0
    %v84 = vsel %vm66, %v73, 0.0
    %v85 = vsel %vm67, %v73, 0.0
    %v86 = vsel %vm68, %v73, 0.0
    %v87 = vsel %vm69, %v73, 0.0
    %v88 = vsel %vm70, %v73, 0.0
    %v89 = vsel %vm71, %v73, 0.0
    %v90 = vlaneseq
    %v91 = vshrl.u32 %v90, 7
    %v92 = vsub.s32 1, %v91
    %v93 = vrot.slane %v31, %v92
    %v94 = vlaneseq
    %v95 = vshrl.u32 %v94, 7
    %v96 = vsub.s32 1, %v95
    %v97 = vrot.slane %v32, %v96
    %v98 = vlaneseq
    %v99 = vshrl.u32 %v98, 7
    %v100 = vsub.s32 1, %v99
    %v101 = vrot.slane %v33, %v100
    %v102 = vlaneseq
    %v103 = vshrl.u32 %v102, 7
    %v104 = vsub.s32 1, %v103
    %v105 = vrot.slane %v34, %v104
    %vm106 = vcmp.eq.s32.totalorder %v36, %v93
    %vm107 = vcmp.eq.s32.totalorder %v36, %v97
    %vm108 = vcmp.eq.s32.totalorder %v36, %v101
    %vm109 = vcmp.eq.s32.totalorder %v36, %v105
    %vm110 = vcmp.eq.s32.totalorder %v37, %v93
    %vm111 = vcmp.eq.s32.totalorder %v37, %v97
    %vm112 = vcmp.eq.s32.totalorder %v37, %v101
    %vm113 = vcmp.eq.s32.totalorder %v37, %v105
    %vm114 = vcmp.eq.s32.totalorder %v38, %v93
    %vm115 = vcmp.eq.s32.totalorder %v38, %v97
    %vm116 = vcmp.eq.s32.totalorder %v38, %v101
    %vm117 = vcmp.eq.s32.totalorder %v38, %v105
    %vm118 = vcmp.eq.s32.totalorder %v39, %v93
    %vm119 = vcmp.eq.s32.totalorder %v39, %v97
    %vm120 = vcmp.eq.s32.totalorder %v39, %v101
    %vm121 = vcmp.eq.s32.totalorder %v39, %v105
    %s122 = sld [smem:[#allocation3 + $0x1]]
    %v123 = vstv %s122
    %v124 = vsel %vm106, %v123, 0.0
    %v125 = vsel %vm107, %v123, 0.0
    %v126 = vsel %vm108, %v123, 0.0
    %v127 = vsel %vm109, %v123, 0.0
    %v128 = vsel %vm110, %v123, 0.0
    %v129 = vsel %vm111, %v123, 0.0
    %v130 = vsel %vm112, %v123, 0.0
    %v131 = vsel %vm113, %v123, 0.0
    %v132 = vsel %vm114, %v123, 0.0
    %v133 = vsel %vm115, %v123, 0.0
    %v134 = vsel %vm116, %v123, 0.0
    %v135 = vsel %vm117, %v123, 0.0
    %v136 = vsel %vm118, %v123, 0.0
    %v137 = vsel %vm119, %v123, 0.0
    %v138 = vsel %vm120, %v123, 0.0
    %v139 = vsel %vm121, %v123, 0.0
    %v140 = vadd.f32 %v74, %v124
    %v141 = vadd.f32 %v75, %v125
    %v142 = vadd.f32 %v76, %v126
    %v143 = vadd.f32 %v77, %v127
    %v144 = vadd.f32 %v78, %v128
    %v145 = vadd.f32 %v79, %v129
    %v146 = vadd.f32 %v80, %v130
    %v147 = vadd.f32 %v81, %v131
    %v148 = vadd.f32 %v82, %v132
    %v149 = vadd.f32 %v83, %v133
    %v150 = vadd.f32 %v84, %v134
    %v151 = vadd.f32 %v85, %v135
    %v152 = vadd.f32 %v86, %v136
    %v153 = vadd.f32 %v87, %v137
    %v154 = vadd.f32 %v88, %v138
    %v155 = vadd.f32 %v89, %v139
    %v156 = vlaneseq
    %v157 = vshrl.u32 %v156, 7
    %v158 = vsub.s32 2, %v157
    %v159 = vrot.slane %v31, %v158
    %v160 = vlaneseq
    %v161 = vshrl.u32 %v160, 7
    %v162 = vsub.s32 2, %v161
    %v163 = vrot.slane %v32, %v162
    %v164 = vlaneseq
    %v165 = vshrl.u32 %v164, 7
    %v166 = vsub.s32 2, %v165
    %v167 = vrot.slane %v33, %v166
    %v168 = vlaneseq
    %v169 = vshrl.u32 %v168, 7
    %v170 = vsub.s32 2, %v169
    %v171 = vrot.slane %v34, %v170
    %vm172 = vcmp.eq.s32.totalorder %v36, %v159
    %vm173 = vcmp.eq.s32.totalorder %v36, %v163
    %vm174 = vcmp.eq.s32.totalorder %v36, %v167
    %vm175 = vcmp.eq.s32.totalorder %v36, %v171
    %vm176 = vcmp.eq.s32.totalorder %v37, %v159
    %vm177 = vcmp.eq.s32.totalorder %v37, %v163
    %vm178 = vcmp.eq.s32.totalorder %v37, %v167
    %vm179 = vcmp.eq.s32.totalorder %v37, %v171
    %vm180 = vcmp.eq.s32.totalorder %v38, %v159
    %vm181 = vcmp.eq.s32.totalorder %v38, %v163
    %vm182 = vcmp.eq.s32.totalorder %v38, %v167
    %vm183 = vcmp.eq.s32.totalorder %v38, %v171
    %vm184 = vcmp.eq.s32.totalorder %v39, %v159
    %vm185 = vcmp.eq.s32.totalorder %v39, %v163
    %vm186 = vcmp.eq.s32.totalorder %v39, %v167
    %vm187 = vcmp.eq.s32.totalorder %v39, %v171
    %s188 = sld [smem:[#allocation3 + $0x2]]
    %v189 = vstv %s188
    %v190 = vsel %vm172, %v189, 0.0
    %v191 = vsel %vm173, %v189, 0.0
    %v192 = vsel %vm174, %v189, 0.0
    %v193 = vsel %vm175, %v189, 0.0
    %v194 = vsel %vm176, %v189, 0.0
    %v195 = vsel %vm177, %v189, 0.0
    %v196 = vsel %vm178, %v189, 0.0
    %v197 = vsel %vm179, %v189, 0.0
    %v198 = vsel %vm180, %v189, 0.0
    %v199 = vsel %vm181, %v189, 0.0
    %v200 = vsel %vm182, %v189, 0.0
    %v201 = vsel %vm183, %v189, 0.0
    %v202 = vsel %vm184, %v189, 0.0
    %v203 = vsel %vm185, %v189, 0.0
    %v204 = vsel %vm186, %v189, 0.0
    %v205 = vsel %vm187, %v189, 0.0
    %v206 = vadd.f32 %v140, %v190
    %v207 = vadd.f32 %v141, %v191
    %v208 = vadd.f32 %v142, %v192
    %v209 = vadd.f32 %v143, %v193
    %v210 = vadd.f32 %v144, %v194
    %v211 = vadd.f32 %v145, %v195
    %v212 = vadd.f32 %v146, %v196
    %v213 = vadd.f32 %v147, %v197
    %v214 = vadd.f32 %v148, %v198
    %v215 = vadd.f32 %v149, %v199
    %v216 = vadd.f32 %v150, %v200
    %v217 = vadd.f32 %v151, %v201
    %v218 = vadd.f32 %v152, %v202
    %v219 = vadd.f32 %v153, %v203
    %v220 = vadd.f32 %v154, %v204
    %v221 = vadd.f32 %v155, %v205
    %v222 = vlaneseq
    %v223 = vshrl.u32 %v222, 7
    %v224 = vsub.s32 3, %v223
    %v225 = vrot.slane %v31, %v224
    %v226 = vlaneseq
    %v227 = vshrl.u32 %v226, 7
    %v228 = vsub.s32 3, %v227
    %v229 = vrot.slane %v32, %v228
    %v230 = vlaneseq
    %v231 = vshrl.u32 %v230, 7
    %v232 = vsub.s32 3, %v231
    %v233 = vrot.slane %v33, %v232
    %v234 = vlaneseq
    %v235 = vshrl.u32 %v234, 7
    %v236 = vsub.s32 3, %v235
    %v237 = vrot.slane %v34, %v236
    %vm238 = vcmp.eq.s32.totalorder %v36, %v225
    %vm239 = vcmp.eq.s32.totalorder %v36, %v229
    %vm240 = vcmp.eq.s32.totalorder %v36, %v233
    %vm241 = vcmp.eq.s32.totalorder %v36, %v237
    %vm242 = vcmp.eq.s32.totalorder %v37, %v225
    %vm243 = vcmp.eq.s32.totalorder %v37, %v229
    %vm244 = vcmp.eq.s32.totalorder %v37, %v233
    %vm245 = vcmp.eq.s32.totalorder %v37, %v237
    %vm246 = vcmp.eq.s32.totalorder %v38, %v225
    %vm247 = vcmp.eq.s32.totalorder %v38, %v229
    %vm248 = vcmp.eq.s32.totalorder %v38, %v233
    %vm249 = vcmp.eq.s32.totalorder %v38, %v237
    %vm250 = vcmp.eq.s32.totalorder %v39, %v225
    %vm251 = vcmp.eq.s32.totalorder %v39, %v229
    %vm252 = vcmp.eq.s32.totalorder %v39, %v233
    %vm253 = vcmp.eq.s32.totalorder %v39, %v237
    %s254 = sld [smem:[#allocation3 + $0x3]]
    %v255 = vstv %s254
    %v256 = vsel %vm238, %v255, 0.0
    %v257 = vsel %vm239, %v255, 0.0
    %v258 = vsel %vm240, %v255, 0.0
    %v259 = vsel %vm241, %v255, 0.0
    %v260 = vsel %vm242, %v255, 0.0
    %v261 = vsel %vm243, %v255, 0.0
    %v262 = vsel %vm244, %v255, 0.0
    %v263 = vsel %vm245, %v255, 0.0
    %v264 = vsel %vm246, %v255, 0.0
    %v265 = vsel %vm247, %v255, 0.0
    %v266 = vsel %vm248, %v255, 0.0
    %v267 = vsel %vm249, %v255, 0.0
    %v268 = vsel %vm250, %v255, 0.0
    %v269 = vsel %vm251, %v255, 0.0
    %v270 = vsel %vm252, %v255, 0.0
    %v271 = vsel %vm253, %v255, 0.0
    %v272 = vadd.f32 %v206, %v256
    %v273 = vadd.f32 %v207, %v257
    %v274 = vadd.f32 %v208, %v258
    %v275 = vadd.f32 %v209, %v259
    %v276 = vadd.f32 %v210, %v260
    %v277 = vadd.f32 %v211, %v261
    %v278 = vadd.f32 %v212, %v262
    %v279 = vadd.f32 %v213, %v263
    %v280 = vadd.f32 %v214, %v264
    %v281 = vadd.f32 %v215, %v265
    %v282 = vadd.f32 %v216, %v266
    %v283 = vadd.f32 %v217, %v267
    %v284 = vadd.f32 %v218, %v268
    %v285 = vadd.f32 %v219, %v269
    %v286 = vadd.f32 %v220, %v270
    %v287 = vadd.f32 %v221, %v271
    %v288 = vlaneseq
    %v289 = vshrl.u32 %v288, 7
    %v290 = vsub.s32 4, %v289
    %v291 = vrot.slane %v31, %v290
    %v292 = vlaneseq
    %v293 = vshrl.u32 %v292, 7
    %v294 = vsub.s32 4, %v293
    %v295 = vrot.slane %v32, %v294
    %v296 = vlaneseq
    %v297 = vshrl.u32 %v296, 7
    %v298 = vsub.s32 4, %v297
    %v299 = vrot.slane %v33, %v298
    %v300 = vlaneseq
    %v301 = vshrl.u32 %v300, 7
    %v302 = vsub.s32 4, %v301
    %v303 = vrot.slane %v34, %v302
    %vm304 = vcmp.eq.s32.totalorder %v36, %v291
    %vm305 = vcmp.eq.s32.totalorder %v36, %v295
    %vm306 = vcmp.eq.s32.totalorder %v36, %v299
    %vm307 = vcmp.eq.s32.totalorder %v36, %v303
    %vm308 = vcmp.eq.s32.totalorder %v37, %v291
    %vm309 = vcmp.eq.s32.totalorder %v37, %v295
    %vm310 = vcmp.eq.s32.totalorder %v37, %v299
    %vm311 = vcmp.eq.s32.totalorder %v37, %v303
    %vm312 = vcmp.eq.s32.totalorder %v38, %v291
    %vm313 = vcmp.eq.s32.totalorder %v38, %v295
    %vm314 = vcmp.eq.s32.totalorder %v38, %v299
    %vm315 = vcmp.eq.s32.totalorder %v38, %v303
    %vm316 = vcmp.eq.s32.totalorder %v39, %v291
    %vm317 = vcmp.eq.s32.totalorder %v39, %v295
    %vm318 = vcmp.eq.s32.totalorder %v39, %v299
    %vm319 = vcmp.eq.s32.totalorder %v39, %v303
    %s320 = sld [smem:[#allocation3 + $0x4]]
    %v321 = vstv %s320
    %v322 = vsel %vm304, %v321, 0.0
    %v323 = vsel %vm305, %v321, 0.0
    %v324 = vsel %vm306, %v321, 0.0
    %v325 = vsel %vm307, %v321, 0.0
    %v326 = vsel %vm308, %v321, 0.0
    %v327 = vsel %vm309, %v321, 0.0
    %v328 = vsel %vm310, %v321, 0.0
    %v329 = vsel %vm311, %v321, 0.0
    %v330 = vsel %vm312, %v321, 0.0
    %v331 = vsel %vm313, %v321, 0.0
    %v332 = vsel %vm314, %v321, 0.0
    %v333 = vsel %vm315, %v321, 0.0
    %v334 = vsel %vm316, %v321, 0.0
    %v335 = vsel %vm317, %v321, 0.0
    %v336 = vsel %vm318, %v321, 0.0
    %v337 = vsel %vm319, %v321, 0.0
    %v338 = vadd.f32 %v272, %v322
    %v339 = vadd.f32 %v273, %v323
    %v340 = vadd.f32 %v274, %v324
    %v341 = vadd.f32 %v275, %v325
    %v342 = vadd.f32 %v276, %v326
    %v343 = vadd.f32 %v277, %v327
    %v344 = vadd.f32 %v278, %v328
    %v345 = vadd.f32 %v279, %v329
    %v346 = vadd.f32 %v280, %v330
    %v347 = vadd.f32 %v281, %v331
    %v348 = vadd.f32 %v282, %v332
    %v349 = vadd.f32 %v283, %v333
    %v350 = vadd.f32 %v284, %v334
    %v351 = vadd.f32 %v285, %v335
    %v352 = vadd.f32 %v286, %v336
    %v353 = vadd.f32 %v287, %v337
    %v354 = vlaneseq
    %v355 = vshrl.u32 %v354, 7
    %v356 = vsub.s32 5, %v355
    %v357 = vrot.slane %v31, %v356
    %v358 = vlaneseq
    %v359 = vshrl.u32 %v358, 7
    %v360 = vsub.s32 5, %v359
    %v361 = vrot.slane %v32, %v360
    %v362 = vlaneseq
    %v363 = vshrl.u32 %v362, 7
    %v364 = vsub.s32 5, %v363
    %v365 = vrot.slane %v33, %v364
    %v366 = vlaneseq
    %v367 = vshrl.u32 %v366, 7
    %v368 = vsub.s32 5, %v367
    %v369 = vrot.slane %v34, %v368
    %vm370 = vcmp.eq.s32.totalorder %v36, %v357
    %vm371 = vcmp.eq.s32.totalorder %v36, %v361
    %vm372 = vcmp.eq.s32.totalorder %v36, %v365
    %vm373 = vcmp.eq.s32.totalorder %v36, %v369
    %vm374 = vcmp.eq.s32.totalorder %v37, %v357
    %vm375 = vcmp.eq.s32.totalorder %v37, %v361
    %vm376 = vcmp.eq.s32.totalorder %v37, %v365
    %vm377 = vcmp.eq.s32.totalorder %v37, %v369
    %vm378 = vcmp.eq.s32.totalorder %v38, %v357
    %vm379 = vcmp.eq.s32.totalorder %v38, %v361
    %vm380 = vcmp.eq.s32.totalorder %v38, %v365
    %vm381 = vcmp.eq.s32.totalorder %v38, %v369
    %vm382 = vcmp.eq.s32.totalorder %v39, %v357
    %vm383 = vcmp.eq.s32.totalorder %v39, %v361
    %vm384 = vcmp.eq.s32.totalorder %v39, %v365
    %vm385 = vcmp.eq.s32.totalorder %v39, %v369
    %s386 = sld [smem:[#allocation3 + $0x5]]
    %v387 = vstv %s386
    %v388 = vsel %vm370, %v387, 0.0
    %v389 = vsel %vm371, %v387, 0.0
    %v390 = vsel %vm372, %v387, 0.0
    %v391 = vsel %vm373, %v387, 0.0
    %v392 = vsel %vm374, %v387, 0.0
    %v393 = vsel %vm375, %v387, 0.0
    %v394 = vsel %vm376, %v387, 0.0
    %v395 = vsel %vm377, %v387, 0.0
    %v396 = vsel %vm378, %v387, 0.0
    %v397 = vsel %vm379, %v387, 0.0
    %v398 = vsel %vm380, %v387, 0.0
    %v399 = vsel %vm381, %v387, 0.0
    %v400 = vsel %vm382, %v387, 0.0
    %v401 = vsel %vm383, %v387, 0.0
    %v402 = vsel %vm384, %v387, 0.0
    %v403 = vsel %vm385, %v387, 0.0
    %v404 = vadd.f32 %v338, %v388
    %v405 = vadd.f32 %v339, %v389
    %v406 = vadd.f32 %v340, %v390
    %v407 = vadd.f32 %v341, %v391
    %v408 = vadd.f32 %v342, %v392
    %v409 = vadd.f32 %v343, %v393
    %v410 = vadd.f32 %v344, %v394
    %v411 = vadd.f32 %v345, %v395
    %v412 = vadd.f32 %v346, %v396
    %v413 = vadd.f32 %v347, %v397
    %v414 = vadd.f32 %v348, %v398
    %v415 = vadd.f32 %v349, %v399
    %v416 = vadd.f32 %v350, %v400
    %v417 = vadd.f32 %v351, %v401
    %v418 = vadd.f32 %v352, %v402
    %v419 = vadd.f32 %v353, %v403
    %v420 = vld [vmem:[%s1] sm:$0xff]
    %v421 = vld [vmem:[%s1 + $0x8] sm:$0xff]
    %vm422 = vcmask 252928
    %v424 = vsel %vm422, %v420, 0
    %v427 = vsel %vm422, %v421, 0
    %vm429 = vcmask 1046528
    %v431 = vsel %vm429, %v416, 0
    %v434 = vsel %vm429, %v417, 0
    %v437 = vsel %vm429, %v418, 0
    %v440 = vsel %vm429, %v419, 0
    %v442 = vand.u32 %v405, 4294901760
    %443 = vmatprep.subr.mxu0 %v442
    %v444 = vand.u32 %v404, 4294901760
    %445 = vmatpush1.msra.mxu0 %v444
    %v446 = vand.u32 %v409, 4294901760
    %447 = vmatprep.subr.mxu0 %v446
    %v448 = vand.u32 %v408, 4294901760
    %449 = vmatpush1.msra.mxu0 %v448
    %v450 = vand.u32 %v413, 4294901760
    %451 = vmatprep.subr.mxu0 %v450
    %v452 = vand.u32 %v412, 4294901760
    %453 = vmatpush1.msra.mxu0 %v452
    %v454 = vand.u32 %v434, 4294901760
    %455 = vmatprep.subr.mxu0 %v454
    %v456 = vand.u32 %v431, 4294901760
    %457 = vmatpush1.msra.mxu0 %v456
    %458 = vmatprep.subr.mxu0 0.0
    %459 = vmatpush1.msra.mxu0 0.0
    %460 = vmatprep.subr.mxu0 0.0
    %461 = vmatpush1.msra.mxu0 0.0
    %462 = vmatprep.subr.mxu0 0.0
    %463 = vmatpush1.msra.mxu0 0.0
    %464 = vmatprep.subr.mxu0 0.0
    %465 = vmatpush1.msra.mxu0 0.0
    %466 = vmatprep.subr.mxu0 0.0
    %467 = vmatpush1.msra.mxu0 0.0
    %468 = vmatprep.subr.mxu0 0.0
    %469 = vmatpush1.msra.mxu0 0.0
    %470 = vmatprep.subr.mxu0 0.0
    %471 = vmatpush1.msra.mxu0 0.0
    %472 = vmatprep.subr.mxu0 0.0
    %473 = vmatpush1.msra.mxu0 0.0
    %474 = vmatprep.subr.mxu0 0.0
    %475 = vmatpush1.msra.mxu0 0.0
    %476 = vmatprep.subr.mxu0 0.0
    %477 = vmatpush1.msra.mxu0 0.0
    %478 = vmatprep.subr.mxu0 0.0
    %479 = vmatpush1.msra.mxu0 0.0
    %480 = vmatprep.subr.mxu0 0.0
    %481 = vmatpush1.msra.mxu0 0.0
    %482 = vmatprep.subr.mxu0 0.0
    %483 = vmatpush1.msra.mxu0 0.0
    %484 = vmatprep.subr.mxu0 0.0
    %485 = vmatpush1.msra.mxu0 0.0
    %486 = vmatprep.subr.mxu0 0.0
    %487 = vmatpush1.msra.mxu0 0.0
    %488 = vmatprep.subr.mxu0 0.0
    %489 = vmatpush1.msra.mxu0 0.0
    %490 = vmatprep.subr.mxu0 0.0
    %491 = vmatpush1.msra.mxu0 0.0
    %492 = vmatprep.subr.mxu0 0.0
    %493 = vmatpush1.msra.mxu0 0.0
    %494 = vmatprep.subr.mxu0 0.0
    %495 = vmatpush1.msra.mxu0 0.0
    %496 = vmatprep.subr.mxu0 0.0
    %497 = vmatpush1.msra.mxu0 0.0
    %498 = vmatprep.subr.mxu0 0.0
    %499 = vmatpush1.msra.mxu0 0.0
    %500 = vmatprep.subr.mxu0 0.0
    %501 = vmatpush1.msra.mxu0 0.0
    %502 = vmatprep.subr.mxu0 0.0
    %503 = vmatpush1.msra.mxu0 0.0
    %504 = vmatprep.subr.mxu0 0.0
    %505 = vmatpush1.msra.mxu0 0.0
    %506 = vmatprep.subr.mxu0 0.0
    %507 = vmatpush1.msra.mxu0 0.0
    %508 = vmatprep.subr.mxu0 0.0
    %509 = vmatpush1.msra.mxu0 0.0
    %510 = vmatprep.subr.mxu0 0.0
    %511 = vmatpush1.msra.mxu0 0.0
    %512 = vmatprep.subr.mxu0 0.0
    %513 = vmatpush1.msra.mxu0 0.0
    %514 = vmatprep.mubr.f32.mxu0 0.0
    %v515 = vand.u32 %v424, 4294901760
    %v516 = vsub.f32 %v424, %v515
    %v517 = vand.u32 %v516, 4294901760
    %v518 = vsub.f32 %v516, %v517
    %v519 = vand.u32 %v518, 4294901760
    %520 = vmatmul.mubr.f32.gmra.mrb[0].mxu0 %v519
    %v521 = vpop.f32.mrb[0].mxu0
    %v522 = vadd.f32 0.0, %v521
    %v523 = vpop.f32.mrb[0].mxu0
    %v524 = vadd.f32 0.0, %v523
    %525 = vmatprep.mubr.f32.mxu0 0.0
    %v526 = vand.u32 %v427, 4294901760
    %v527 = vsub.f32 %v427, %v526
    %v528 = vand.u32 %v527, 4294901760
    %v529 = vsub.f32 %v527, %v528
    %v530 = vand.u32 %v529, 4294901760
    %531 = vmatmul.mubr.f32.gmra.mrb[0].mxu0 %v530
    %v532 = vpop.f32.mrb[0].mxu0
    %v533 = vadd.f32 0.0, %v532
    %v534 = vpop.f32.mrb[0].mxu0
    %v535 = vadd.f32 0.0, %v534
    %536 = vdwg.mxu0
    %v537 = vand.u32 %v405, 4294901760
    %v538 = vsub.f32 %v405, %v537
    %v539 = vand.u32 %v538, 4294901760
    %v540 = vsub.f32 %v538, %v539
    %v541 = vand.u32 %v540, 4294901760
    %542 = vmatprep.subr.mxu0 %v541
    %v543 = vand.u32 %v404, 4294901760
    %v544 = vsub.f32 %v404, %v543
    %v545 = vand.u32 %v544, 4294901760
    %v546 = vsub.f32 %v544, %v545
    %v547 = vand.u32 %v546, 4294901760
    %548 = vmatpush1.msra.mxu0 %v547
    %v549 = vand.u32 %v409, 4294901760
    %v550 = vsub.f32 %v409, %v549
    %v551 = vand.u32 %v550, 4294901760
    %v552 = vsub.f32 %v550, %v551
    %v553 = vand.u32 %v552, 4294901760
    %554 = vmatprep.subr.mxu0 %v553
    %v555 = vand.u32 %v408, 4294901760
    %v556 = vsub.f32 %v408, %v555
    %v557 = vand.u32 %v556, 4294901760
    %v558 = vsub.f32 %v556, %v557
    %v559 = vand.u32 %v558, 4294901760
    %560 = vmatpush1.msra.mxu0 %v559
    %v561 = vand.u32 %v413, 4294901760
    %v562 = vsub.f32 %v413, %v561
    %v563 = vand.u32 %v562, 4294901760
    %v564 = vsub.f32 %v562, %v563
    %v565 = vand.u32 %v564, 4294901760
    %566 = vmatprep.subr.mxu0 %v565
    %v567 = vand.u32 %v412, 4294901760
    %v568 = vsub.f32 %v412, %v567
    %v569 = vand.u32 %v568, 4294901760
    %v570 = vsub.f32 %v568, %v569
    %v571 = vand.u32 %v570, 4294901760
    %572 = vmatpush1.msra.mxu0 %v571
    %v573 = vand.u32 %v434, 4294901760
    %v574 = vsub.f32 %v434, %v573
    %v575 = vand.u32 %v574, 4294901760
    %v576 = vsub.f32 %v574, %v575
    %v577 = vand.u32 %v576, 4294901760
    %578 = vmatprep.subr.mxu0 %v577
    %v579 = vand.u32 %v431, 4294901760
    %v580 = vsub.f32 %v431, %v579
    %v581 = vand.u32 %v580, 4294901760
    %v582 = vsub.f32 %v580, %v581
    %v583 = vand.u32 %v582, 4294901760
    %584 = vmatpush1.msra.mxu0 %v583
    %585 = vmatprep.subr.mxu0 0.0
    %586 = vmatpush1.msra.mxu0 0.0
    %587 = vmatprep.subr.mxu0 0.0
    %588 = vmatpush1.msra.mxu0 0.0
    %589 = vmatprep.subr.mxu0 0.0
    %590 = vmatpush1.msra.mxu0 0.0
    %591 = vmatprep.subr.mxu0 0.0
    %592 = vmatpush1.msra.mxu0 0.0
    %593 = vmatprep.subr.mxu0 0.0
    %594 = vmatpush1.msra.mxu0 0.0
    %595 = vmatprep.subr.mxu0 0.0
    %596 = vmatpush1.msra.mxu0 0.0
    %597 = vmatprep.subr.mxu0 0.0
    %598 = vmatpush1.msra.mxu0 0.0
    %599 = vmatprep.subr.mxu0 0.0
    %600 = vmatpush1.msra.mxu0 0.0
    %601 = vmatprep.subr.mxu0 0.0
    %602 = vmatpush1.msra.mxu0 0.0
    %603 = vmatprep.subr.mxu0 0.0
    %604 = vmatpush1.msra.mxu0 0.0
    %605 = vmatprep.subr.mxu0 0.0
    %606 = vmatpush1.msra.mxu0 0.0
    %607 = vmatprep.subr.mxu0 0.0
    %608 = vmatpush1.msra.mxu0 0.0
    %609 = vmatprep.subr.mxu0 0.0
    %610 = vmatpush1.msra.mxu0 0.0
    %611 = vmatprep.subr.mxu0 0.0
    %612 = vmatpush1.msra.mxu0 0.0
    %613 = vmatprep.subr.mxu0 0.0
    %614 = vmatpush1.msra.mxu0 0.0
    %615 = vmatprep.subr.mxu0 0.0
    %616 = vmatpush1.msra.mxu0 0.0
    %617 = vmatprep.subr.mxu0 0.0
    %618 = vmatpush1.msra.mxu0 0.0
    %619 = vmatprep.subr.mxu0 0.0
    %620 = vmatpush1.msra.mxu0 0.0
    %621 = vmatprep.subr.mxu0 0.0
    %622 = vmatpush1.msra.mxu0 0.0
    %623 = vmatprep.subr.mxu0 0.0
    %624 = vmatpush1.msra.mxu0 0.0
    %625 = vmatprep.subr.mxu0 0.0
    %626 = vmatpush1.msra.mxu0 0.0
    %627 = vmatprep.subr.mxu0 0.0
    %628 = vmatpush1.msra.mxu0 0.0
    %629 = vmatprep.subr.mxu0 0.0
    %630 = vmatpush1.msra.mxu0 0.0
    %631 = vmatprep.subr.mxu0 0.0
    %632 = vmatpush1.msra.mxu0 0.0
    %633 = vmatprep.subr.mxu0 0.0
    %634 = vmatpush1.msra.mxu0 0.0
    %635 = vmatprep.subr.mxu0 0.0
    %636 = vmatpush1.msra.mxu0 0.0
    %637 = vmatprep.subr.mxu0 0.0
    %638 = vmatpush1.msra.mxu0 0.0
    %639 = vmatprep.subr.mxu0 0.0
    %640 = vmatpush1.msra.mxu0 0.0
    %641 = vmatprep.mubr.f32.mxu0 0.0
    %v642 = vand.u32 %v424, 4294901760
    %643 = vmatmul.mubr.f32.gmra.mrb[0].mxu0 %v642
    %v644 = vpop.f32.mrb[0].mxu0
    %v645 = vadd.f32 %v522, %v644
    %v646 = vpop.f32.mrb[0].mxu0
    %v647 = vadd.f32 %v524, %v646
    %648 = vmatprep.mubr.f32.mxu0 0.0
    %v649 = vand.u32 %v427, 4294901760
    %650 = vmatmul.mubr.f32.gmra.mrb[0].mxu0 %v649
    %v651 = vpop.f32.mrb[0].mxu0
    %v652 = vadd.f32 %v533, %v651
    %v653 = vpop.f32.mrb[0].mxu0
    %v654 = vadd.f32 %v535, %v653
    %655 = vdwg.mxu0
    %v656 = vand.u32 %v405, 4294901760
    %v657 = vsub.f32 %v405, %v656
    %658 = vmatprep.subr.mxu0 %v657
    %v659 = vand.u32 %v404, 4294901760
    %v660 = vsub.f32 %v404, %v659
    %661 = vmatpush1.msra.mxu0 %v660
    %v662 = vand.u32 %v409, 4294901760
    %v663 = vsub.f32 %v409, %v662
    %664 = vmatprep.subr.mxu0 %v663
    %v665 = vand.u32 %v408, 4294901760
    %v666 = vsub.f32 %v408, %v665
    %667 = vmatpush1.msra.mxu0 %v666
    %v668 = vand.u32 %v413, 4294901760
    %v669 = vsub.f32 %v413, %v668
    %670 = vmatprep.subr.mxu0 %v669
    %v671 = vand.u32 %v412, 4294901760
    %v672 = vsub.f32 %v412, %v671
    %673 = vmatpush1.msra.mxu0 %v672
    %v674 = vand.u32 %v434, 4294901760
    %v675 = vsub.f32 %v434, %v674
    %676 = vmatprep.subr.mxu0 %v675
    %v677 = vand.u32 %v431, 4294901760
    %v678 = vsub.f32 %v431, %v677
    %679 = vmatpush1.msra.mxu0 %v678
    %680 = vmatprep.subr.mxu0 0.0
    %681 = vmatpush1.msra.mxu0 0.0
    %682 = vmatprep.subr.mxu0 0.0
    %683 = vmatpush1.msra.mxu0 0.0
    %684 = vmatprep.subr.mxu0 0.0
    %685 = vmatpush1.msra.mxu0 0.0
    %686 = vmatprep.subr.mxu0 0.0
    %687 = vmatpush1.msra.mxu0 0.0
    %688 = vmatprep.subr.mxu0 0.0
    %689 = vmatpush1.msra.mxu0 0.0
    %690 = vmatprep.subr.mxu0 0.0
    %691 = vmatpush1.msra.mxu0 0.0
    %692 = vmatprep.subr.mxu0 0.0
    %693 = vmatpush1.msra.mxu0 0.0
    %694 = vmatprep.subr.mxu0 0.0
    %695 = vmatpush1.msra.mxu0 0.0
    %696 = vmatprep.subr.mxu0 0.0
    %697 = vmatpush1.msra.mxu0 0.0
    %698 = vmatprep.subr.mxu0 0.0
    %699 = vmatpush1.msra.mxu0 0.0
    %700 = vmatprep.subr.mxu0 0.0
    %701 = vmatpush1.msra.mxu0 0.0
    %702 = vmatprep.subr.mxu0 0.0
    %703 = vmatpush1.msra.mxu0 0.0
    %704 = vmatprep.subr.mxu0 0.0
    %705 = vmatpush1.msra.mxu0 0.0
    %706 = vmatprep.subr.mxu0 0.0
    %707 = vmatpush1.msra.mxu0 0.0
    %708 = vmatprep.subr.mxu0 0.0
    %709 = vmatpush1.msra.mxu0 0.0
    %710 = vmatprep.subr.mxu0 0.0
    %711 = vmatpush1.msra.mxu0 0.0
    %712 = vmatprep.subr.mxu0 0.0
    %713 = vmatpush1.msra.mxu0 0.0
    %714 = vmatprep.subr.mxu0 0.0
    %715 = vmatpush1.msra.mxu0 0.0
    %716 = vmatprep.subr.mxu0 0.0
    %717 = vmatpush1.msra.mxu0 0.0
    %718 = vmatprep.subr.mxu0 0.0
    %719 = vmatpush1.msra.mxu0 0.0
    %720 = vmatprep.subr.mxu0 0.0
    %721 = vmatpush1.msra.mxu0 0.0
    %722 = vmatprep.subr.mxu0 0.0
    %723 = vmatpush1.msra.mxu0 0.0
    %724 = vmatprep.subr.mxu0 0.0
    %725 = vmatpush1.msra.mxu0 0.0
    %726 = vmatprep.subr.mxu0 0.0
    %727 = vmatpush1.msra.mxu0 0.0
    %728 = vmatprep.subr.mxu0 0.0
    %729 = vmatpush1.msra.mxu0 0.0
    %730 = vmatprep.subr.mxu0 0.0
    %731 = vmatpush1.msra.mxu0 0.0
    %732 = vmatprep.subr.mxu0 0.0
    %733 = vmatpush1.msra.mxu0 0.0
    %734 = vmatprep.subr.mxu0 0.0
    %735 = vmatpush1.msra.mxu0 0.0
    %736 = vmatprep.mubr.f32.mxu0 0.0
    %v737 = vand.u32 %v424, 4294901760
    %v738 = vsub.f32 %v424, %v737
    %739 = vmatmul.mubr.f32.gmra.mrb[0].mxu0 %v738
    %v740 = vpop.f32.mrb[0].mxu0
    %v741 = vadd.f32 %v645, %v740
    %v742 = vpop.f32.mrb[0].mxu0
    %v743 = vadd.f32 %v647, %v742
    %744 = vmatprep.mubr.f32.mxu0 0.0
    %v745 = vand.u32 %v427, 4294901760
    %v746 = vsub.f32 %v427, %v745
    %747 = vmatmul.mubr.f32.gmra.mrb[0].mxu0 %v746
    %v748 = vpop.f32.mrb[0].mxu0
    %v749 = vadd.f32 %v652, %v748
    %v750 = vpop.f32.mrb[0].mxu0
    %v751 = vadd.f32 %v654, %v750
    %752 = vdwg.mxu0
    %v753 = vand.u32 %v405, 4294901760
    %754 = vmatprep.subr.mxu0 %v753
    %v755 = vand.u32 %v404, 4294901760
    %756 = vmatpush1.msra.mxu0 %v755
    %v757 = vand.u32 %v409, 4294901760
    %758 = vmatprep.subr.mxu0 %v757
    %v759 = vand.u32 %v408, 4294901760
    %760 = vmatpush1.msra.mxu0 %v759
    %v761 = vand.u32 %v413, 4294901760
    %762 = vmatprep.subr.mxu0 %v761
    %v763 = vand.u32 %v412, 4294901760
    %764 = vmatpush1.msra.mxu0 %v763
    %v765 = vand.u32 %v434, 4294901760
    %766 = vmatprep.subr.mxu0 %v765
    %v767 = vand.u32 %v431, 4294901760
    %768 = vmatpush1.msra.mxu0 %v767
    %769 = vmatprep.subr.mxu0 0.0
    %770 = vmatpush1.msra.mxu0 0.0
    %771 = vmatprep.subr.mxu0 0.0
    %772 = vmatpush1.msra.mxu0 0.0
    %773 = vmatprep.subr.mxu0 0.0
    %774 = vmatpush1.msra.mxu0 0.0
    %775 = vmatprep.subr.mxu0 0.0
    %776 = vmatpush1.msra.mxu0 0.0
    %777 = vmatprep.subr.mxu0 0.0
    %778 = vmatpush1.msra.mxu0 0.0
    %779 = vmatprep.subr.mxu0 0.0
    %780 = vmatpush1.msra.mxu0 0.0
    %781 = vmatprep.subr.mxu0 0.0
    %782 = vmatpush1.msra.mxu0 0.0
    %783 = vmatprep.subr.mxu0 0.0
    %784 = vmatpush1.msra.mxu0 0.0
    %785 = vmatprep.subr.mxu0 0.0
    %786 = vmatpush1.msra.mxu0 0.0
    %787 = vmatprep.subr.mxu0 0.0
    %788 = vmatpush1.msra.mxu0 0.0
    %789 = vmatprep.subr.mxu0 0.0
    %790 = vmatpush1.msra.mxu0 0.0
    %791 = vmatprep.subr.mxu0 0.0
    %792 = vmatpush1.msra.mxu0 0.0
    %793 = vmatprep.subr.mxu0 0.0
    %794 = vmatpush1.msra.mxu0 0.0
    %795 = vmatprep.subr.mxu0 0.0
    %796 = vmatpush1.msra.mxu0 0.0
    %797 = vmatprep.subr.mxu0 0.0
    %798 = vmatpush1.msra.mxu0 0.0
    %799 = vmatprep.subr.mxu0 0.0
    %800 = vmatpush1.msra.mxu0 0.0
    %801 = vmatprep.subr.mxu0 0.0
    %802 = vmatpush1.msra.mxu0 0.0
    %803 = vmatprep.subr.mxu0 0.0
    %804 = vmatpush1.msra.mxu0 0.0
    %805 = vmatprep.subr.mxu0 0.0
    %806 = vmatpush1.msra.mxu0 0.0
    %807 = vmatprep.subr.mxu0 0.0
    %808 = vmatpush1.msra.mxu0 0.0
    %809 = vmatprep.subr.mxu0 0.0
    %810 = vmatpush1.msra.mxu0 0.0
    %811 = vmatprep.subr.mxu0 0.0
    %812 = vmatpush1.msra.mxu0 0.0
    %813 = vmatprep.subr.mxu0 0.0
    %814 = vmatpush1.msra.mxu0 0.0
    %815 = vmatprep.subr.mxu0 0.0
    %816 = vmatpush1.msra.mxu0 0.0
    %817 = vmatprep.subr.mxu0 0.0
    %818 = vmatpush1.msra.mxu0 0.0
    %819 = vmatprep.subr.mxu0 0.0
    %820 = vmatpush1.msra.mxu0 0.0
    %821 = vmatprep.subr.mxu0 0.0
    %822 = vmatpush1.msra.mxu0 0.0
    %823 = vmatprep.subr.mxu0 0.0
    %824 = vmatpush1.msra.mxu0 0.0
    %825 = vmatprep.mubr.f32.mxu0 0.0
    %v826 = vand.u32 %v424, 4294901760
    %v827 = vsub.f32 %v424, %v826
    %v828 = vand.u32 %v827, 4294901760
    %829 = vmatmul.mubr.f32.gmra.mrb[0].mxu0 %v828
    %v830 = vpop.f32.mrb[0].mxu0
    %v831 = vadd.f32 %v741, %v830
    %v832 = vpop.f32.mrb[0].mxu0
    %v833 = vadd.f32 %v743, %v832
    %834 = vmatprep.mubr.f32.mxu0 0.0
    %v835 = vand.u32 %v427, 4294901760
    %v836 = vsub.f32 %v427, %v835
    %v837 = vand.u32 %v836, 4294901760
    %838 = vmatmul.mubr.f32.gmra.mrb[0].mxu0 %v837
    %v839 = vpop.f32.mrb[0].mxu0
    %v840 = vadd.f32 %v749, %v839
    %v841 = vpop.f32.mrb[0].mxu0
    %v842 = vadd.f32 %v751, %v841
    %843 = vdwg.mxu0
    %v844 = vand.u32 %v405, 4294901760
    %v845 = vsub.f32 %v405, %v844
    %v846 = vand.u32 %v845, 4294901760
    %847 = vmatprep.subr.mxu0 %v846
    %v848 = vand.u32 %v404, 4294901760
    %v849 = vsub.f32 %v404, %v848
    %v850 = vand.u32 %v849, 4294901760
    %851 = vmatpush1.msra.mxu0 %v850
    %v852 = vand.u32 %v409, 4294901760
    %v853 = vsub.f32 %v409, %v852
    %v854 = vand.u32 %v853, 4294901760
    %855 = vmatprep.subr.mxu0 %v854
    %v856 = vand.u32 %v408, 4294901760
    %v857 = vsub.f32 %v408, %v856
    %v858 = vand.u32 %v857, 4294901760
    %859 = vmatpush1.msra.mxu0 %v858
    %v860 = vand.u32 %v413, 4294901760
    %v861 = vsub.f32 %v413, %v860
    %v862 = vand.u32 %v861, 4294901760
    %863 = vmatprep.subr.mxu0 %v862
    %v864 = vand.u32 %v412, 4294901760
    %v865 = vsub.f32 %v412, %v864
    %v866 = vand.u32 %v865, 4294901760
    %867 = vmatpush1.msra.mxu0 %v866
    %v868 = vand.u32 %v434, 4294901760
    %v869 = vsub.f32 %v434, %v868
    %v870 = vand.u32 %v869, 4294901760
    %871 = vmatprep.subr.mxu0 %v870
    %v872 = vand.u32 %v431, 4294901760
    %v873 = vsub.f32 %v431, %v872
    %v874 = vand.u32 %v873, 4294901760
    %875 = vmatpush1.msra.mxu0 %v874
    %876 = vmatprep.subr.mxu0 0.0
    %877 = vmatpush1.msra.mxu0 0.0
    %878 = vmatprep.subr.mxu0 0.0
    %879 = vmatpush1.msra.mxu0 0.0
    %880 = vmatprep.subr.mxu0 0.0
    %881 = vmatpush1.msra.mxu0 0.0
    %882 = vmatprep.subr.mxu0 0.0
    %883 = vmatpush1.msra.mxu0 0.0
    %884 = vmatprep.subr.mxu0 0.0
    %885 = vmatpush1.msra.mxu0 0.0
    %886 = vmatprep.subr.mxu0 0.0
    %887 = vmatpush1.msra.mxu0 0.0
    %888 = vmatprep.subr.mxu0 0.0
    %889 = vmatpush1.msra.mxu0 0.0
    %890 = vmatprep.subr.mxu0 0.0
    %891 = vmatpush1.msra.mxu0 0.0
    %892 = vmatprep.subr.mxu0 0.0
    %893 = vmatpush1.msra.mxu0 0.0
    %894 = vmatprep.subr.mxu0 0.0
    %895 = vmatpush1.msra.mxu0 0.0
    %896 = vmatprep.subr.mxu0 0.0
    %897 = vmatpush1.msra.mxu0 0.0
    %898 = vmatprep.subr.mxu0 0.0
    %899 = vmatpush1.msra.mxu0 0.0
    %900 = vmatprep.subr.mxu0 0.0
    %901 = vmatpush1.msra.mxu0 0.0
    %902 = vmatprep.subr.mxu0 0.0
    %903 = vmatpush1.msra.mxu0 0.0
    %904 = vmatprep.subr.mxu0 0.0
    %905 = vmatpush1.msra.mxu0 0.0
    %906 = vmatprep.subr.mxu0 0.0
    %907 = vmatpush1.msra.mxu0 0.0
    %908 = vmatprep.subr.mxu0 0.0
    %909 = vmatpush1.msra.mxu0 0.0
    %910 = vmatprep.subr.mxu0 0.0
    %911 = vmatpush1.msra.mxu0 0.0
    %912 = vmatprep.subr.mxu0 0.0
    %913 = vmatpush1.msra.mxu0 0.0
    %914 = vmatprep.subr.mxu0 0.0
    %915 = vmatpush1.msra.mxu0 0.0
    %916 = vmatprep.subr.mxu0 0.0
    %917 = vmatpush1.msra.mxu0 0.0
    %918 = vmatprep.subr.mxu0 0.0
    %919 = vmatpush1.msra.mxu0 0.0
    %920 = vmatprep.subr.mxu0 0.0
    %921 = vmatpush1.msra.mxu0 0.0
    %922 = vmatprep.subr.mxu0 0.0
    %923 = vmatpush1.msra.mxu0 0.0
    %924 = vmatprep.subr.mxu0 0.0
    %925 = vmatpush1.msra.mxu0 0.0
    %926 = vmatprep.subr.mxu0 0.0
    %927 = vmatpush1.msra.mxu0 0.0
    %928 = vmatprep.subr.mxu0 0.0
    %929 = vmatpush1.msra.mxu0 0.0
    %930 = vmatprep.subr.mxu0 0.0
    %931 = vmatpush1.msra.mxu0 0.0
    %932 = vmatprep.mubr.f32.mxu0 0.0
    %v933 = vand.u32 %v424, 4294901760
    %934 = vmatmul.mubr.f32.gmra.mrb[0].mxu0 %v933
    %v935 = vpop.f32.mrb[0].mxu0
    %v936 = vadd.f32 %v831, %v935
    %v937 = vpop.f32.mrb[0].mxu0
    %v938 = vadd.f32 %v833, %v937
    %939 = vmatprep.mubr.f32.mxu0 0.0
    %v940 = vand.u32 %v427, 4294901760
    %941 = vmatmul.mubr.f32.gmra.mrb[0].mxu0 %v940
    %v942 = vpop.f32.mrb[0].mxu0
    %v943 = vadd.f32 %v840, %v942
    %v944 = vpop.f32.mrb[0].mxu0
    %v945 = vadd.f32 %v842, %v944
    %946 = vdwg.mxu0
    %v947 = vand.u32 %v405, 4294901760
    %948 = vmatprep.subr.mxu0 %v947
    %v949 = vand.u32 %v404, 4294901760
    %950 = vmatpush1.msra.mxu0 %v949
    %v951 = vand.u32 %v409, 4294901760
    %952 = vmatprep.subr.mxu0 %v951
    %v953 = vand.u32 %v408, 4294901760
    %954 = vmatpush1.msra.mxu0 %v953
    %v955 = vand.u32 %v413, 4294901760
    %956 = vmatprep.subr.mxu0 %v955
    %v957 = vand.u32 %v412, 4294901760
    %958 = vmatpush1.msra.mxu0 %v957
    %v959 = vand.u32 %v434, 4294901760
    %960 = vmatprep.subr.mxu0 %v959
    %v961 = vand.u32 %v431, 4294901760
    %962 = vmatpush1.msra.mxu0 %v961
    %963 = vmatprep.subr.mxu0 0.0
    %964 = vmatpush1.msra.mxu0 0.0
    %965 = vmatprep.subr.mxu0 0.0
    %966 = vmatpush1.msra.mxu0 0.0
    %967 = vmatprep.subr.mxu0 0.0
    %968 = vmatpush1.msra.mxu0 0.0
    %969 = vmatprep.subr.mxu0 0.0
    %970 = vmatpush1.msra.mxu0 0.0
    %971 = vmatprep.subr.mxu0 0.0
    %972 = vmatpush1.msra.mxu0 0.0
    %973 = vmatprep.subr.mxu0 0.0
    %974 = vmatpush1.msra.mxu0 0.0
    %975 = vmatprep.subr.mxu0 0.0
    %976 = vmatpush1.msra.mxu0 0.0
    %977 = vmatprep.subr.mxu0 0.0
    %978 = vmatpush1.msra.mxu0 0.0
    %979 = vmatprep.subr.mxu0 0.0
    %980 = vmatpush1.msra.mxu0 0.0
    %981 = vmatprep.subr.mxu0 0.0
    %982 = vmatpush1.msra.mxu0 0.0
    %983 = vmatprep.subr.mxu0 0.0
    %984 = vmatpush1.msra.mxu0 0.0
    %985 = vmatprep.subr.mxu0 0.0
    %986 = vmatpush1.msra.mxu0 0.0
    %987 = vmatprep.subr.mxu0 0.0
    %988 = vmatpush1.msra.mxu0 0.0
    %989 = vmatprep.subr.mxu0 0.0
    %990 = vmatpush1.msra.mxu0 0.0
    %991 = vmatprep.subr.mxu0 0.0
    %992 = vmatpush1.msra.mxu0 0.0
    %993 = vmatprep.subr.mxu0 0.0
    %994 = vmatpush1.msra.mxu0 0.0
    %995 = vmatprep.subr.mxu0 0.0
    %996 = vmatpush1.msra.mxu0 0.0
    %997 = vmatprep.subr.mxu0 0.0
    %998 = vmatpush1.msra.mxu0 0.0
    %999 = vmatprep.subr.mxu0 0.0
    %1000 = vmatpush1.msra.mxu0 0.0
    %1001 = vmatprep.subr.mxu0 0.0
    %1002 = vmatpush1.msra.mxu0 0.0
    %1003 = vmatprep.subr.mxu0 0.0
    %1004 = vmatpush1.msra.mxu0 0.0
    %1005 = vmatprep.subr.mxu0 0.0
    %1006 = vmatpush1.msra.mxu0 0.0
    %1007 = vmatprep.subr.mxu0 0.0
    %1008 = vmatpush1.msra.mxu0 0.0
    %1009 = vmatprep.subr.mxu0 0.0
    %1010 = vmatpush1.msra.mxu0 0.0
    %1011 = vmatprep.subr.mxu0 0.0
    %1012 = vmatpush1.msra.mxu0 0.0
    %1013 = vmatprep.subr.mxu0 0.0
    %1014 = vmatpush1.msra.mxu0 0.0
    %1015 = vmatprep.subr.mxu0 0.0
    %1016 = vmatpush1.msra.mxu0 0.0
    %1017 = vmatprep.subr.mxu0 0.0
    %1018 = vmatpush1.msra.mxu0 0.0
    %1019 = vmatprep.mubr.f32.mxu0 0.0
    %v1020 = vand.u32 %v424, 4294901760
    %1021 = vmatmul.mubr.f32.gmra.mrb[0].mxu0 %v1020
    %v1022 = vpop.f32.mrb[0].mxu0
    %v1023 = vadd.f32 %v936, %v1022
    %v1024 = vpop.f32.mrb[0].mxu0
    %v1025 = vadd.f32 %v938, %v1024
    %1026 = vmatprep.mubr.f32.mxu0 0.0
    %v1027 = vand.u32 %v427, 4294901760
    %1028 = vmatmul.mubr.f32.gmra.mrb[0].mxu0 %v1027
    %v1029 = vpop.f32.mrb[0].mxu0
    %v1030 = vadd.f32 %v943, %v1029
    %v1031 = vpop.f32.mrb[0].mxu0
    %v1032 = vadd.f32 %v945, %v1031
    %1033 = vdwg.mxu0
    %v1034 = vand.u32 %v407, 4294901760
    %1035 = vmatprep.subr.mxu0 %v1034
    %v1036 = vand.u32 %v406, 4294901760
    %1037 = vmatpush1.msra.mxu0 %v1036
    %v1038 = vand.u32 %v411, 4294901760
    %1039 = vmatprep.subr.mxu0 %v1038
    %v1040 = vand.u32 %v410, 4294901760
    %1041 = vmatpush1.msra.mxu0 %v1040
    %v1042 = vand.u32 %v415, 4294901760
    %1043 = vmatprep.subr.mxu0 %v1042
    %v1044 = vand.u32 %v414, 4294901760
    %1045 = vmatpush1.msra.mxu0 %v1044
    %v1046 = vand.u32 %v440, 4294901760
    %1047 = vmatprep.subr.mxu0 %v1046
    %v1048 = vand.u32 %v437, 4294901760
    %1049 = vmatpush1.msra.mxu0 %v1048
    %1050 = vmatprep.subr.mxu0 0.0
    %1051 = vmatpush1.msra.mxu0 0.0
    %1052 = vmatprep.subr.mxu0 0.0
    %1053 = vmatpush1.msra.mxu0 0.0
    %1054 = vmatprep.subr.mxu0 0.0
    %1055 = vmatpush1.msra.mxu0 0.0
    %1056 = vmatprep.subr.mxu0 0.0
    %1057 = vmatpush1.msra.mxu0 0.0
    %1058 = vmatprep.subr.mxu0 0.0
    %1059 = vmatpush1.msra.mxu0 0.0
    %1060 = vmatprep.subr.mxu0 0.0
    %1061 = vmatpush1.msra.mxu0 0.0
    %1062 = vmatprep.subr.mxu0 0.0
    %1063 = vmatpush1.msra.mxu0 0.0
    %1064 = vmatprep.subr.mxu0 0.0
    %1065 = vmatpush1.msra.mxu0 0.0
    %1066 = vmatprep.subr.mxu0 0.0
    %1067 = vmatpush1.msra.mxu0 0.0
    %1068 = vmatprep.subr.mxu0 0.0
    %1069 = vmatpush1.msra.mxu0 0.0
    %1070 = vmatprep.subr.mxu0 0.0
    %1071 = vmatpush1.msra.mxu0 0.0
    %1072 = vmatprep.subr.mxu0 0.0
    %1073 = vmatpush1.msra.mxu0 0.0
    %1074 = vmatprep.subr.mxu0 0.0
    %1075 = vmatpush1.msra.mxu0 0.0
    %1076 = vmatprep.subr.mxu0 0.0
    %1077 = vmatpush1.msra.mxu0 0.0
    %1078 = vmatprep.subr.mxu0 0.0
    %1079 = vmatpush1.msra.mxu0 0.0
    %1080 = vmatprep.subr.mxu0 0.0
    %1081 = vmatpush1.msra.mxu0 0.0
    %1082 = vmatprep.subr.mxu0 0.0
    %1083 = vmatpush1.msra.mxu0 0.0
    %1084 = vmatprep.subr.mxu0 0.0
    %1085 = vmatpush1.msra.mxu0 0.0
    %1086 = vmatprep.subr.mxu0 0.0
    %1087 = vmatpush1.msra.mxu0 0.0
    %1088 = vmatprep.subr.mxu0 0.0
    %1089 = vmatpush1.msra.mxu0 0.0
    %1090 = vmatprep.subr.mxu0 0.0
    %1091 = vmatpush1.msra.mxu0 0.0
    %1092 = vmatprep.subr.mxu0 0.0
    %1093 = vmatpush1.msra.mxu0 0.0
    %1094 = vmatprep.subr.mxu0 0.0
    %1095 = vmatpush1.msra.mxu0 0.0
    %1096 = vmatprep.subr.mxu0 0.0
    %1097 = vmatpush1.msra.mxu0 0.0
    %1098 = vmatprep.subr.mxu0 0.0
    %1099 = vmatpush1.msra.mxu0 0.0
    %1100 = vmatprep.subr.mxu0 0.0
    %1101 = vmatpush1.msra.mxu0 0.0
    %1102 = vmatprep.subr.mxu0 0.0
    %1103 = vmatpush1.msra.mxu0 0.0
    %1104 = vmatprep.subr.mxu0 0.0
    %1105 = vmatpush1.msra.mxu0 0.0
    %1106 = vmatprep.mubr.f32.mxu0 0.0
    %v1107 = vand.u32 %v424, 4294901760
    %v1108 = vsub.f32 %v424, %v1107
    %v1109 = vand.u32 %v1108, 4294901760
    %v1110 = vsub.f32 %v1108, %v1109
    %v1111 = vand.u32 %v1110, 4294901760
    %1112 = vmatmul.mubr.f32.gmra.mrb[0].mxu0 %v1111
    %v1113 = vpop.f32.mrb[0].mxu0
    %v1114 = vadd.f32 0.0, %v1113
    %v1115 = vpop.f32.mrb[0].mxu0
    %v1116 = vadd.f32 0.0, %v1115
    %1117 = vmatprep.mubr.f32.mxu0 0.0
    %v1118 = vand.u32 %v427, 4294901760
    %v1119 = vsub.f32 %v427, %v1118
    %v1120 = vand.u32 %v1119, 4294901760
    %v1121 = vsub.f32 %v1119, %v1120
    %v1122 = vand.u32 %v1121, 4294901760
    %1123 = vmatmul.mubr.f32.gmra.mrb[0].mxu0 %v1122
    %v1124 = vpop.f32.mrb[0].mxu0
    %v1125 = vadd.f32 0.0, %v1124
    %v1126 = vpop.f32.mrb[0].mxu0
    %v1127 = vadd.f32 0.0, %v1126
    %1128 = vdwg.mxu0
    %v1129 = vand.u32 %v407, 4294901760
    %v1130 = vsub.f32 %v407, %v1129
    %v1131 = vand.u32 %v1130, 4294901760
    %v1132 = vsub.f32 %v1130, %v1131
    %v1133 = vand.u32 %v1132, 4294901760
    %1134 = vmatprep.subr.mxu0 %v1133
    %v1135 = vand.u32 %v406, 4294901760
    %v1136 = vsub.f32 %v406, %v1135
    %v1137 = vand.u32 %v1136, 4294901760
    %v1138 = vsub.f32 %v1136, %v1137
    %v1139 = vand.u32 %v1138, 4294901760
    %1140 = vmatpush1.msra.mxu0 %v1139
    %v1141 = vand.u32 %v411, 4294901760
    %v1142 = vsub.f32 %v411, %v1141
    %v1143 = vand.u32 %v1142, 4294901760
    %v1144 = vsub.f32 %v1142, %v1143
    %v1145 = vand.u32 %v1144, 4294901760
    %1146 = vmatprep.subr.mxu0 %v1145
    %v1147 = vand.u32 %v410, 4294901760
    %v1148 = vsub.f32 %v410, %v1147
    %v1149 = vand.u32 %v1148, 4294901760
    %v1150 = vsub.f32 %v1148, %v1149
    %v1151 = vand.u32 %v1150, 4294901760
    %1152 = vmatpush1.msra.mxu0 %v1151
    %v1153 = vand.u32 %v415, 4294901760
    %v1154 = vsub.f32 %v415, %v1153
    %v1155 = vand.u32 %v1154, 4294901760
    %v1156 = vsub.f32 %v1154, %v1155
    %v1157 = vand.u32 %v1156, 4294901760
    %1158 = vmatprep.subr.mxu0 %v1157
    %v1159 = vand.u32 %v414, 4294901760
    %v1160 = vsub.f32 %v414, %v1159
    %v1161 = vand.u32 %v1160, 4294901760
    %v1162 = vsub.f32 %v1160, %v1161
    %v1163 = vand.u32 %v1162, 4294901760
    %1164 = vmatpush1.msra.mxu0 %v1163
    %v1165 = vand.u32 %v440, 4294901760
    %v1166 = vsub.f32 %v440, %v1165
    %v1167 = vand.u32 %v1166, 4294901760
    %v1168 = vsub.f32 %v1166, %v1167
    %v1169 = vand.u32 %v1168, 4294901760
    %1170 = vmatprep.subr.mxu0 %v1169
    %v1171 = vand.u32 %v437, 4294901760
    %v1172 = vsub.f32 %v437, %v1171
    %v1173 = vand.u32 %v1172, 4294901760
    %v1174 = vsub.f32 %v1172, %v1173
    %v1175 = vand.u32 %v1174, 4294901760
    %1176 = vmatpush1.msra.mxu0 %v1175
    %1177 = vmatprep.subr.mxu0 0.0
    %1178 = vmatpush1.msra.mxu0 0.0
    %1179 = vmatprep.subr.mxu0 0.0
    %1180 = vmatpush1.msra.mxu0 0.0
    %1181 = vmatprep.subr.mxu0 0.0
    %1182 = vmatpush1.msra.mxu0 0.0
    %1183 = vmatprep.subr.mxu0 0.0
    %1184 = vmatpush1.msra.mxu0 0.0
    %1185 = vmatprep.subr.mxu0 0.0
    %1186 = vmatpush1.msra.mxu0 0.0
    %1187 = vmatprep.subr.mxu0 0.0
    %1188 = vmatpush1.msra.mxu0 0.0
    %1189 = vmatprep.subr.mxu0 0.0
    %1190 = vmatpush1.msra.mxu0 0.0
    %1191 = vmatprep.subr.mxu0 0.0
    %1192 = vmatpush1.msra.mxu0 0.0
    %1193 = vmatprep.subr.mxu0 0.0
    %1194 = vmatpush1.msra.mxu0 0.0
    %1195 = vmatprep.subr.mxu0 0.0
    %1196 = vmatpush1.msra.mxu0 0.0
    %1197 = vmatprep.subr.mxu0 0.0
    %1198 = vmatpush1.msra.mxu0 0.0
    %1199 = vmatprep.subr.mxu0 0.0
    %1200 = vmatpush1.msra.mxu0 0.0
    %1201 = vmatprep.subr.mxu0 0.0
    %1202 = vmatpush1.msra.mxu0 0.0
    %1203 = vmatprep.subr.mxu0 0.0
    %1204 = vmatpush1.msra.mxu0 0.0
    %1205 = vmatprep.subr.mxu0 0.0
    %1206 = vmatpush1.msra.mxu0 0.0
    %1207 = vmatprep.subr.mxu0 0.0
    %1208 = vmatpush1.msra.mxu0 0.0
    %1209 = vmatprep.subr.mxu0 0.0
    %1210 = vmatpush1.msra.mxu0 0.0
    %1211 = vmatprep.subr.mxu0 0.0
    %1212 = vmatpush1.msra.mxu0 0.0
    %1213 = vmatprep.subr.mxu0 0.0
    %1214 = vmatpush1.msra.mxu0 0.0
    %1215 = vmatprep.subr.mxu0 0.0
    %1216 = vmatpush1.msra.mxu0 0.0
    %1217 = vmatprep.subr.mxu0 0.0
    %1218 = vmatpush1.msra.mxu0 0.0
    %1219 = vmatprep.subr.mxu0 0.0
    %1220 = vmatpush1.msra.mxu0 0.0
    %1221 = vmatprep.subr.mxu0 0.0
    %1222 = vmatpush1.msra.mxu0 0.0
    %1223 = vmatprep.subr.mxu0 0.0
    %1224 = vmatpush1.msra.mxu0 0.0
    %1225 = vmatprep.subr.mxu0 0.0
    %1226 = vmatpush1.msra.mxu0 0.0
    %1227 = vmatprep.subr.mxu0 0.0
    %1228 = vmatpush1.msra.mxu0 0.0
    %1229 = vmatprep.subr.mxu0 0.0
    %1230 = vmatpush1.msra.mxu0 0.0
    %1231 = vmatprep.subr.mxu0 0.0
    %1232 = vmatpush1.msra.mxu0 0.0
    %1233 = vmatprep.mubr.f32.mxu0 0.0
    %v1234 = vand.u32 %v424, 4294901760
    %1235 = vmatmul.mubr.f32.gmra.mrb[0].mxu0 %v1234
    %v1236 = vpop.f32.mrb[0].mxu0
    %v1237 = vadd.f32 %v1114, %v1236
    %v1238 = vpop.f32.mrb[0].mxu0
    %v1239 = vadd.f32 %v1116, %v1238
    %1240 = vmatprep.mubr.f32.mxu0 0.0
    %v1241 = vand.u32 %v427, 4294901760
    %1242 = vmatmul.mubr.f32.gmra.mrb[0].mxu0 %v1241
    %v1243 = vpop.f32.mrb[0].mxu0
    %v1244 = vadd.f32 %v1125, %v1243
    %v1245 = vpop.f32.mrb[0].mxu0
    %v1246 = vadd.f32 %v1127, %v1245
    %1247 = vdwg.mxu0
    %v1248 = vand.u32 %v407, 4294901760
    %v1249 = vsub.f32 %v407, %v1248
    %1250 = vmatprep.subr.mxu0 %v1249
    %v1251 = vand.u32 %v406, 4294901760
    %v1252 = vsub.f32 %v406, %v1251
    %1253 = vmatpush1.msra.mxu0 %v1252
    %v1254 = vand.u32 %v411, 4294901760
    %v1255 = vsub.f32 %v411, %v1254
    %1256 = vmatprep.subr.mxu0 %v1255
    %v1257 = vand.u32 %v410, 4294901760
    %v1258 = vsub.f32 %v410, %v1257
    %1259 = vmatpush1.msra.mxu0 %v1258
    %v1260 = vand.u32 %v415, 4294901760
    %v1261 = vsub.f32 %v415, %v1260
    %1262 = vmatprep.subr.mxu0 %v1261
    %v1263 = vand.u32 %v414, 4294901760
    %v1264 = vsub.f32 %v414, %v1263
    %1265 = vmatpush1.msra.mxu0 %v1264
    %v1266 = vand.u32 %v440, 4294901760
    %v1267 = vsub.f32 %v440, %v1266
    %1268 = vmatprep.subr.mxu0 %v1267
    %v1269 = vand.u32 %v437, 4294901760
    %v1270 = vsub.f32 %v437, %v1269
    %1271 = vmatpush1.msra.mxu0 %v1270
    %1272 = vmatprep.subr.mxu0 0.0
    %1273 = vmatpush1.msra.mxu0 0.0
    %1274 = vmatprep.subr.mxu0 0.0
    %1275 = vmatpush1.msra.mxu0 0.0
    %1276 = vmatprep.subr.mxu0 0.0
    %1277 = vmatpush1.msra.mxu0 0.0
    %1278 = vmatprep.subr.mxu0 0.0
    %1279 = vmatpush1.msra.mxu0 0.0
    %1280 = vmatprep.subr.mxu0 0.0
    %1281 = vmatpush1.msra.mxu0 0.0
    %1282 = vmatprep.subr.mxu0 0.0
    %1283 = vmatpush1.msra.mxu0 0.0
    %1284 = vmatprep.subr.mxu0 0.0
    %1285 = vmatpush1.msra.mxu0 0.0
    %1286 = vmatprep.subr.mxu0 0.0
    %1287 = vmatpush1.msra.mxu0 0.0
    %1288 = vmatprep.subr.mxu0 0.0
    %1289 = vmatpush1.msra.mxu0 0.0
    %1290 = vmatprep.subr.mxu0 0.0
    %1291 = vmatpush1.msra.mxu0 0.0
    %1292 = vmatprep.subr.mxu0 0.0
    %1293 = vmatpush1.msra.mxu0 0.0
    %1294 = vmatprep.subr.mxu0 0.0
    %1295 = vmatpush1.msra.mxu0 0.0
    %1296 = vmatprep.subr.mxu0 0.0
    %1297 = vmatpush1.msra.mxu0 0.0
    %1298 = vmatprep.subr.mxu0 0.0
    %1299 = vmatpush1.msra.mxu0 0.0
    %1300 = vmatprep.subr.mxu0 0.0
    %1301 = vmatpush1.msra.mxu0 0.0
    %1302 = vmatprep.subr.mxu0 0.0
    %1303 = vmatpush1.msra.mxu0 0.0
    %1304 = vmatprep.subr.mxu0 0.0
    %1305 = vmatpush1.msra.mxu0 0.0
    %1306 = vmatprep.subr.mxu0 0.0
    %1307 = vmatpush1.msra.mxu0 0.0
    %1308 = vmatprep.subr.mxu0 0.0
    %1309 = vmatpush1.msra.mxu0 0.0
    %1310 = vmatprep.subr.mxu0 0.0
    %1311 = vmatpush1.msra.mxu0 0.0
    %1312 = vmatprep.subr.mxu0 0.0
    %1313 = vmatpush1.msra.mxu0 0.0
    %1314 = vmatprep.subr.mxu0 0.0
    %1315 = vmatpush1.msra.mxu0 0.0
    %1316 = vmatprep.subr.mxu0 0.0
    %1317 = vmatpush1.msra.mxu0 0.0
    %1318 = vmatprep.subr.mxu0 0.0
    %1319 = vmatpush1.msra.mxu0 0.0
    %1320 = vmatprep.subr.mxu0 0.0
    %1321 = vmatpush1.msra.mxu0 0.0
    %1322 = vmatprep.subr.mxu0 0.0
    %1323 = vmatpush1.msra.mxu0 0.0
    %1324 = vmatprep.subr.mxu0 0.0
    %1325 = vmatpush1.msra.mxu0 0.0
    %1326 = vmatprep.subr.mxu0 0.0
    %1327 = vmatpush1.msra.mxu0 0.0
    %1328 = vmatprep.mubr.f32.mxu0 0.0
    %v1329 = vand.u32 %v424, 4294901760
    %v1330 = vsub.f32 %v424, %v1329
    %1331 = vmatmul.mubr.f32.gmra.mrb[0].mxu0 %v1330
    %v1332 = vpop.f32.mrb[0].mxu0
    %v1333 = vadd.f32 %v1237, %v1332
    %v1334 = vpop.f32.mrb[0].mxu0
    %v1335 = vadd.f32 %v1239, %v1334
    %1336 = vmatprep.mubr.f32.mxu0 0.0
    %v1337 = vand.u32 %v427, 4294901760
    %v1338 = vsub.f32 %v427, %v1337
    %1339 = vmatmul.mubr.f32.gmra.mrb[0].mxu0 %v1338
    %v1340 = vpop.f32.mrb[0].mxu0
    %v1341 = vadd.f32 %v1244, %v1340
    %v1342 = vpop.f32.mrb[0].mxu0
    %v1343 = vadd.f32 %v1246, %v1342
    %1344 = vdwg.mxu0
    %v1345 = vand.u32 %v407, 4294901760
    %1346 = vmatprep.subr.mxu0 %v1345
    %v1347 = vand.u32 %v406, 4294901760
    %1348 = vmatpush1.msra.mxu0 %v1347
    %v1349 = vand.u32 %v411, 4294901760
    %1350 = vmatprep.subr.mxu0 %v1349
    %v1351 = vand.u32 %v410, 4294901760
    %1352 = vmatpush1.msra.mxu0 %v1351
    %v1353 = vand.u32 %v415, 4294901760
    %1354 = vmatprep.subr.mxu0 %v1353
    %v1355 = vand.u32 %v414, 4294901760
    %1356 = vmatpush1.msra.mxu0 %v1355
    %v1357 = vand.u32 %v440, 4294901760
    %1358 = vmatprep.subr.mxu0 %v1357
    %v1359 = vand.u32 %v437, 4294901760
    %1360 = vmatpush1.msra.mxu0 %v1359
    %1361 = vmatprep.subr.mxu0 0.0
    %1362 = vmatpush1.msra.mxu0 0.0
    %1363 = vmatprep.subr.mxu0 0.0
    %1364 = vmatpush1.msra.mxu0 0.0
    %1365 = vmatprep.subr.mxu0 0.0
    %1366 = vmatpush1.msra.mxu0 0.0
    %1367 = vmatprep.subr.mxu0 0.0
    %1368 = vmatpush1.msra.mxu0 0.0
    %1369 = vmatprep.subr.mxu0 0.0
    %1370 = vmatpush1.msra.mxu0 0.0
    %1371 = vmatprep.subr.mxu0 0.0
    %1372 = vmatpush1.msra.mxu0 0.0
    %1373 = vmatprep.subr.mxu0 0.0
    %1374 = vmatpush1.msra.mxu0 0.0
    %1375 = vmatprep.subr.mxu0 0.0
    %1376 = vmatpush1.msra.mxu0 0.0
    %1377 = vmatprep.subr.mxu0 0.0
    %1378 = vmatpush1.msra.mxu0 0.0
    %1379 = vmatprep.subr.mxu0 0.0
    %1380 = vmatpush1.msra.mxu0 0.0
    %1381 = vmatprep.subr.mxu0 0.0
    %1382 = vmatpush1.msra.mxu0 0.0
    %1383 = vmatprep.subr.mxu0 0.0
    %1384 = vmatpush1.msra.mxu0 0.0
    %1385 = vmatprep.subr.mxu0 0.0
    %1386 = vmatpush1.msra.mxu0 0.0
    %1387 = vmatprep.subr.mxu0 0.0
    %1388 = vmatpush1.msra.mxu0 0.0
    %1389 = vmatprep.subr.mxu0 0.0
    %1390 = vmatpush1.msra.mxu0 0.0
    %1391 = vmatprep.subr.mxu0 0.0
    %1392 = vmatpush1.msra.mxu0 0.0
    %1393 = vmatprep.subr.mxu0 0.0
    %1394 = vmatpush1.msra.mxu0 0.0
    %1395 = vmatprep.subr.mxu0 0.0
    %1396 = vmatpush1.msra.mxu0 0.0
    %1397 = vmatprep.subr.mxu0 0.0
    %1398 = vmatpush1.msra.mxu0 0.0
    %1399 = vmatprep.subr.mxu0 0.0
    %1400 = vmatpush1.msra.mxu0 0.0
    %1401 = vmatprep.subr.mxu0 0.0
    %1402 = vmatpush1.msra.mxu0 0.0
    %1403 = vmatprep.subr.mxu0 0.0
    %1404 = vmatpush1.msra.mxu0 0.0
    %1405 = vmatprep.subr.mxu0 0.0
    %1406 = vmatpush1.msra.mxu0 0.0
    %1407 = vmatprep.subr.mxu0 0.0
    %1408 = vmatpush1.msra.mxu0 0.0
    %1409 = vmatprep.subr.mxu0 0.0
    %1410 = vmatpush1.msra.mxu0 0.0
    %1411 = vmatprep.subr.mxu0 0.0
    %1412 = vmatpush1.msra.mxu0 0.0
    %1413 = vmatprep.subr.mxu0 0.0
    %1414 = vmatpush1.msra.mxu0 0.0
    %1415 = vmatprep.subr.mxu0 0.0
    %1416 = vmatpush1.msra.mxu0 0.0
    %1417 = vmatprep.mubr.f32.mxu0 0.0
    %v1418 = vand.u32 %v424, 4294901760
    %v1419 = vsub.f32 %v424, %v1418
    %v1420 = vand.u32 %v1419, 4294901760
    %1421 = vmatmul.mubr.f32.gmra.mrb[0].mxu0 %v1420
    %v1422 = vpop.f32.mrb[0].mxu0
    %v1423 = vadd.f32 %v1333, %v1422
    %v1424 = vpop.f32.mrb[0].mxu0
    %v1425 = vadd.f32 %v1335, %v1424
    %1426 = vmatprep.mubr.f32.mxu0 0.0
    %v1427 = vand.u32 %v427, 4294901760
    %v1428 = vsub.f32 %v427, %v1427
    %v1429 = vand.u32 %v1428, 4294901760
    %1430 = vmatmul.mubr.f32.gmra.mrb[0].mxu0 %v1429
    %v1431 = vpop.f32.mrb[0].mxu0
    %v1432 = vadd.f32 %v1341, %v1431
    %v1433 = vpop.f32.mrb[0].mxu0
    %v1434 = vadd.f32 %v1343, %v1433
    %1435 = vdwg.mxu0
    %v1436 = vand.u32 %v407, 4294901760
    %v1437 = vsub.f32 %v407, %v1436
    %v1438 = vand.u32 %v1437, 4294901760
    %1439 = vmatprep.subr.mxu0 %v1438
    %v1440 = vand.u32 %v406, 4294901760
    %v1441 = vsub.f32 %v406, %v1440
    %v1442 = vand.u32 %v1441, 4294901760
    %1443 = vmatpush1.msra.mxu0 %v1442
    %v1444 = vand.u32 %v411, 4294901760
    %v1445 = vsub.f32 %v411, %v1444
    %v1446 = vand.u32 %v1445, 4294901760
    %1447 = vmatprep.subr.mxu0 %v1446
    %v1448 = vand.u32 %v410, 4294901760
    %v1449 = vsub.f32 %v410, %v1448
    %v1450 = vand.u32 %v1449, 4294901760
    %1451 = vmatpush1.msra.mxu0 %v1450
    %v1452 = vand.u32 %v415, 4294901760
    %v1453 = vsub.f32 %v415, %v1452
    %v1454 = vand.u32 %v1453, 4294901760
    %1455 = vmatprep.subr.mxu0 %v1454
    %v1456 = vand.u32 %v414, 4294901760
    %v1457 = vsub.f32 %v414, %v1456
    %v1458 = vand.u32 %v1457, 4294901760
    %1459 = vmatpush1.msra.mxu0 %v1458
    %v1460 = vand.u32 %v440, 4294901760
    %v1461 = vsub.f32 %v440, %v1460
    %v1462 = vand.u32 %v1461, 4294901760
    %1463 = vmatprep.subr.mxu0 %v1462
    %v1464 = vand.u32 %v437, 4294901760
    %v1465 = vsub.f32 %v437, %v1464
    %v1466 = vand.u32 %v1465, 4294901760
    %1467 = vmatpush1.msra.mxu0 %v1466
    %1468 = vmatprep.subr.mxu0 0.0
    %1469 = vmatpush1.msra.mxu0 0.0
    %1470 = vmatprep.subr.mxu0 0.0
    %1471 = vmatpush1.msra.mxu0 0.0
    %1472 = vmatprep.subr.mxu0 0.0
    %1473 = vmatpush1.msra.mxu0 0.0
    %1474 = vmatprep.subr.mxu0 0.0
    %1475 = vmatpush1.msra.mxu0 0.0
    %1476 = vmatprep.subr.mxu0 0.0
    %1477 = vmatpush1.msra.mxu0 0.0
    %1478 = vmatprep.subr.mxu0 0.0
    %1479 = vmatpush1.msra.mxu0 0.0
    %1480 = vmatprep.subr.mxu0 0.0
    %1481 = vmatpush1.msra.mxu0 0.0
    %1482 = vmatprep.subr.mxu0 0.0
    %1483 = vmatpush1.msra.mxu0 0.0
    %1484 = vmatprep.subr.mxu0 0.0
    %1485 = vmatpush1.msra.mxu0 0.0
    %1486 = vmatprep.subr.mxu0 0.0
    %1487 = vmatpush1.msra.mxu0 0.0
    %1488 = vmatprep.subr.mxu0 0.0
    %1489 = vmatpush1.msra.mxu0 0.0
    %1490 = vmatprep.subr.mxu0 0.0
    %1491 = vmatpush1.msra.mxu0 0.0
    %1492 = vmatprep.subr.mxu0 0.0
    %1493 = vmatpush1.msra.mxu0 0.0
    %1494 = vmatprep.subr.mxu0 0.0
    %1495 = vmatpush1.msra.mxu0 0.0
    %1496 = vmatprep.subr.mxu0 0.0
    %1497 = vmatpush1.msra.mxu0 0.0
    %1498 = vmatprep.subr.mxu0 0.0
    %1499 = vmatpush1.msra.mxu0 0.0
    %1500 = vmatprep.subr.mxu0 0.0
    %1501 = vmatpush1.msra.mxu0 0.0
    %1502 = vmatprep.subr.mxu0 0.0
    %1503 = vmatpush1.msra.mxu0 0.0
    %1504 = vmatprep.subr.mxu0 0.0
    %1505 = vmatpush1.msra.mxu0 0.0
    %1506 = vmatprep.subr.mxu0 0.0
    %1507 = vmatpush1.msra.mxu0 0.0
    %1508 = vmatprep.subr.mxu0 0.0
    %1509 = vmatpush1.msra.mxu0 0.0
    %1510 = vmatprep.subr.mxu0 0.0
    %1511 = vmatpush1.msra.mxu0 0.0
    %1512 = vmatprep.subr.mxu0 0.0
    %1513 = vmatpush1.msra.mxu0 0.0
    %1514 = vmatprep.subr.mxu0 0.0
    %1515 = vmatpush1.msra.mxu0 0.0
    %1516 = vmatprep.subr.mxu0 0.0
    %1517 = vmatpush1.msra.mxu0 0.0
    %1518 = vmatprep.subr.mxu0 0.0
    %1519 = vmatpush1.msra.mxu0 0.0
    %1520 = vmatprep.subr.mxu0 0.0
    %1521 = vmatpush1.msra.mxu0 0.0
    %1522 = vmatprep.subr.mxu0 0.0
    %1523 = vmatpush1.msra.mxu0 0.0
    %1524 = vmatprep.mubr.f32.mxu0 0.0
    %v1525 = vand.u32 %v424, 4294901760
    %1526 = vmatmul.mubr.f32.gmra.mrb[0].mxu0 %v1525
    %v1527 = vpop.f32.mrb[0].mxu0
    %v1528 = vadd.f32 %v1423, %v1527
    %v1529 = vpop.f32.mrb[0].mxu0
    %v1530 = vadd.f32 %v1425, %v1529
    %1531 = vmatprep.mubr.f32.mxu0 0.0
    %v1532 = vand.u32 %v427, 4294901760
    %1533 = vmatmul.mubr.f32.gmra.mrb[0].mxu0 %v1532
    %v1534 = vpop.f32.mrb[0].mxu0
    %v1535 = vadd.f32 %v1432, %v1534
    %v1536 = vpop.f32.mrb[0].mxu0
    %v1537 = vadd.f32 %v1434, %v1536
    %1538 = vdwg.mxu0
    %v1539 = vand.u32 %v407, 4294901760
    %1540 = vmatprep.subr.mxu0 %v1539
    %v1541 = vand.u32 %v406, 4294901760
    %1542 = vmatpush1.msra.mxu0 %v1541
    %v1543 = vand.u32 %v411, 4294901760
    %1544 = vmatprep.subr.mxu0 %v1543
    %v1545 = vand.u32 %v410, 4294901760
    %1546 = vmatpush1.msra.mxu0 %v1545
    %v1547 = vand.u32 %v415, 4294901760
    %1548 = vmatprep.subr.mxu0 %v1547
    %v1549 = vand.u32 %v414, 4294901760
    %1550 = vmatpush1.msra.mxu0 %v1549
    %v1551 = vand.u32 %v440, 4294901760
    %1552 = vmatprep.subr.mxu0 %v1551
    %v1553 = vand.u32 %v437, 4294901760
    %1554 = vmatpush1.msra.mxu0 %v1553
    %1555 = vmatprep.subr.mxu0 0.0
    %1556 = vmatpush1.msra.mxu0 0.0
    %1557 = vmatprep.subr.mxu0 0.0
    %1558 = vmatpush1.msra.mxu0 0.0
    %1559 = vmatprep.subr.mxu0 0.0
    %1560 = vmatpush1.msra.mxu0 0.0
    %1561 = vmatprep.subr.mxu0 0.0
    %1562 = vmatpush1.msra.mxu0 0.0
    %1563 = vmatprep.subr.mxu0 0.0
    %1564 = vmatpush1.msra.mxu0 0.0
    %1565 = vmatprep.subr.mxu0 0.0
    %1566 = vmatpush1.msra.mxu0 0.0
    %1567 = vmatprep.subr.mxu0 0.0
    %1568 = vmatpush1.msra.mxu0 0.0
    %1569 = vmatprep.subr.mxu0 0.0
    %1570 = vmatpush1.msra.mxu0 0.0
    %1571 = vmatprep.subr.mxu0 0.0
    %1572 = vmatpush1.msra.mxu0 0.0
    %1573 = vmatprep.subr.mxu0 0.0
    %1574 = vmatpush1.msra.mxu0 0.0
    %1575 = vmatprep.subr.mxu0 0.0
    %1576 = vmatpush1.msra.mxu0 0.0
    %1577 = vmatprep.subr.mxu0 0.0
    %1578 = vmatpush1.msra.mxu0 0.0
    %1579 = vmatprep.subr.mxu0 0.0
    %1580 = vmatpush1.msra.mxu0 0.0
    %1581 = vmatprep.subr.mxu0 0.0
    %1582 = vmatpush1.msra.mxu0 0.0
    %1583 = vmatprep.subr.mxu0 0.0
    %1584 = vmatpush1.msra.mxu0 0.0
    %1585 = vmatprep.subr.mxu0 0.0
    %1586 = vmatpush1.msra.mxu0 0.0
    %1587 = vmatprep.subr.mxu0 0.0
    %1588 = vmatpush1.msra.mxu0 0.0
    %1589 = vmatprep.subr.mxu0 0.0
    %1590 = vmatpush1.msra.mxu0 0.0
    %1591 = vmatprep.subr.mxu0 0.0
    %1592 = vmatpush1.msra.mxu0 0.0
    %1593 = vmatprep.subr.mxu0 0.0
    %1594 = vmatpush1.msra.mxu0 0.0
    %1595 = vmatprep.subr.mxu0 0.0
    %1596 = vmatpush1.msra.mxu0 0.0
    %1597 = vmatprep.subr.mxu0 0.0
    %1598 = vmatpush1.msra.mxu0 0.0
    %1599 = vmatprep.subr.mxu0 0.0
    %1600 = vmatpush1.msra.mxu0 0.0
    %1601 = vmatprep.subr.mxu0 0.0
    %1602 = vmatpush1.msra.mxu0 0.0
    %1603 = vmatprep.subr.mxu0 0.0
    %1604 = vmatpush1.msra.mxu0 0.0
    %1605 = vmatprep.subr.mxu0 0.0
    %1606 = vmatpush1.msra.mxu0 0.0
    %1607 = vmatprep.subr.mxu0 0.0
    %1608 = vmatpush1.msra.mxu0 0.0
    %1609 = vmatprep.subr.mxu0 0.0
    %1610 = vmatpush1.msra.mxu0 0.0
    %1611 = vmatprep.mubr.f32.mxu0 0.0
    %v1612 = vand.u32 %v424, 4294901760
    %1613 = vmatmul.mubr.f32.gmra.mrb[0].mxu0 %v1612
    %v1614 = vpop.f32.mrb[0].mxu0
    %v1615 = vadd.f32 %v1528, %v1614
    %v1616 = vpop.f32.mrb[0].mxu0
    %v1617 = vadd.f32 %v1530, %v1616
    %1618 = vmatprep.mubr.f32.mxu0 0.0
    %v1619 = vand.u32 %v427, 4294901760
    %1620 = vmatmul.mubr.f32.gmra.mrb[0].mxu0 %v1619
    %v1621 = vpop.f32.mrb[0].mxu0
    %v1622 = vadd.f32 %v1535, %v1621
    %v1623 = vpop.f32.mrb[0].mxu0
    %v1624 = vadd.f32 %v1537, %v1623
    %1625 = vdwg.mxu0
    %s1626 = sld [smem:[#allocation2]]
    %v1627 = vstv %s1626
    %v1628 = vadd.f32 %v1030, %v1627
    %v1629 = vadd.f32 %v1032, %v1627
    %v1630 = vadd.f32 %v1622, %v1627
    %v1631 = vadd.f32 %v1624, %v1627
    %1632 = vst [vmem:[%s4] sm:$0xff] %v1023
    %1633 = vst [vmem:[%s4 + $0x8] sm:$0xff] %v1025
    %1634 = vst [vmem:[%s4 + $0x10] sm:$0xff] %v1615
    %1635 = vst [vmem:[%s4 + $0x18] sm:$0xff] %v1617
    %v1636 = vmul.f32 %v1023, %v1628
    %v1637 = vmul.f32 %v1025, %v1629
    %v1638 = vmul.f32 %v1615, %v1630
    %v1639 = vmul.f32 %v1617, %v1631
    %1640 = vst [vmem:[%s4 + $0x20] sm:$0xff] %v1636
    %1641 = vst [vmem:[%s4 + $0x28] sm:$0xff] %v1637
    %1642 = vst [vmem:[%s4 + $0x30] sm:$0xff] %v1638
    %1643 = vst [vmem:[%s4 + $0x38] sm:$0xff] %v1639
    %1644 = vst [vmem:[%s4 + $0x40] sm:$0xff] %v1628
    %1645 = vst [vmem:[%s4 + $0x48] sm:$0xff] %v1629
    %1646 = vst [vmem:[%s4 + $0x50] sm:$0xff] %v1630
    %1647 = vst [vmem:[%s4 + $0x58] sm:$0xff] %v1631
    // Predicated region
    $region22: #{_state_repr_forward.1} parent=1 // pred_check
      _
    $region23: #{_state_repr_forward.1} parent=1 // pred_check_branch
      %1649 = sbr.rel (0) target = $region25
    $region24: #{_state_repr_forward.1} parent=1 // pred_region
      _
    $region25: #{_state_repr_forward.1} parent=1 // pred_fallthru
      _
    // Predicated region
    $region26: #{_state_repr_forward.1} parent=1 // pred_check
      _
    $region27: #{_state_repr_forward.1} parent=1 // pred_check_branch
      %1651 = sbr.rel (0) target = $region29
    $region28: #{_state_repr_forward.1} parent=1 // pred_region
      _
    $region29: #{_state_repr_forward.1} parent=1 // pred_fallthru
      _
    %1652 = vsyncpa [#allocation4], 1

</llo_original>
